<compile_context>
chip_gen: v7x
topology: tpu7x:2x2x1
jax: 0.10.0
libtpu: 0.0.40
codegen_flags: <defaults>
</compile_context>

<pallas_src>
import functools

import jax
import jax.numpy as jnp
from jax import lax
from jax.experimental import pallas as pl
from jax.experimental.pallas import tpu as pltpu


# ----------------------------- Pallas kernel ------------------------------- #

def _conv_block_kernel(a_ref, b_ref, bias_ref, o_ref, *, do_norm, do_relu,
                       norm_axis):
    """Fused (bf16 matmul -> f32 acc) + bias + InstanceNorm + LeakyReLU.

    Orientation is chosen by the wrapper so the output's last (lane) dim is as
    dense as possible:
      transposed: a = W^T (Cout,K), b = patches^T (K,P), out (Cout,P),
                  bias (Cout,1), norm over axis 1 (spatial on lanes)
      normal:     a = patches (P,K), b = W (K,Cout),     out (P,Cout),
                  bias (1,Cout), norm over axis 0 (spatial on sublanes)
    """
    x = jnp.dot(a_ref[...], b_ref[...], preferred_element_type=jnp.float32)
    x = x + bias_ref[...]

    if do_norm:
        # InstanceNorm2d (affine=False, eps=1e-5): per channel, per sample,
        # biased variance over spatial positions (matches PyTorch).
        mean = jnp.mean(x, axis=norm_axis, keepdims=True)
        var = jnp.mean(jnp.square(x - mean), axis=norm_axis, keepdims=True)
        x = (x - mean) * lax.rsqrt(var + 1e-5)

    if do_relu:
        x = jnp.where(x >= 0, x, 0.2 * x)          # LeakyReLU(0.2)

    o_ref[...] = x.astype(o_ref.dtype)


# ------------------------------- JAX glue ---------------------------------- #

def _im2col_T(x_nchw, k, stride, pad):
    """(N, C, H, W) -> transposed patches (N, K=k*k*C, P=OH*OW), plus OH, OW."""
    N, C, H, W = x_nchw.shape
    xp = jnp.pad(x_nchw, ((0, 0), (0, 0), (pad, pad), (pad, pad)))
    OH = (H + 2 * pad - k) // stride + 1
    OW = (W + 2 * pad - k) // stride + 1
    cols = []
    for kh in range(k):
        for kw in range(k):
            cols.append(xp[:, :,
                           kh:kh + stride * (OH - 1) + 1:stride,
                           kw:kw + stride * (OW - 1) + 1:stride])
    patches = jnp.stack(cols, axis=1)              # (N, k*k, C, OH, OW)
    return patches.reshape(N, k * k * C, OH * OW), OH, OW


def conv_block(x_nchw, w_oihw, b, *, stride, pad, do_norm, do_relu):
    """Fused conv + (InstanceNorm) + (LeakyReLU) via one Pallas matmul kernel."""
    N, Cin, H, W = x_nchw.shape
    Cout, Cin_w, KH, KW = w_oihw.shape
    assert Cin == Cin_w and KH == KW
    k = KH

    # bf16 operands for the MXU (f32 accumulation inside the kernel); halving
    # the im2col HBM bytes as well.
    x_bf = x_nchw.astype(jnp.bfloat16)
    patches_T, OH, OW = _im2col_T(x_bf, k, stride, pad)    # (N, K, P) bf16
    P, K = OH * OW, k * k * Cin
    # (Cout, Cin, KH, KW) -> (Cout, KH, KW, Cin) -> (Cout, K); K-order matches
    # the im2col (offset-major, channel-minor) layout.
    w_T = jnp.transpose(w_oihw.astype(jnp.bfloat16), (0, 2, 3, 1)).reshape(Cout, K)

    # Lane-dense output: put max(P, Cout) on the last (128-lane) axis.
    use_transposed = P >= Cout
    if use_transposed:
        a = w_T                                                   # (Cout, K)
        a_spec = pl.BlockSpec((Cout, K), lambda n: (0, 0))
        bmat = patches_T                                          # (N, K, P)
        b_spec = pl.BlockSpec((pl.Squeezed(), K, P), lambda n: (n, 0, 0))
        bias = b.reshape(Cout, 1).astype(jnp.float32)
        out_shape, norm_axis = (N, Cout, P), 1
    else:
        a = jnp.swapaxes(patches_T, 1, 2)                         # (N, P, K)
        a_spec = pl.BlockSpec((pl.Squeezed(), P, K), lambda n: (n, 0, 0))
        bmat = jnp.swapaxes(w_T, 0, 1)                            # (K, Cout)
        b_spec = pl.BlockSpec((K, Cout), lambda n: (0, 0))
        bias = b.reshape(1, Cout).astype(jnp.float32)
        out_shape, norm_axis = (N, P, Cout), 0
    bias_spec = pl.BlockSpec(bias.shape, lambda n: (0, 0))
    out_spec = pl.BlockSpec((pl.Squeezed(),) + out_shape[1:], lambda n: (n, 0, 0))

    kernel = functools.partial(_conv_block_kernel, do_norm=do_norm,
                               do_relu=do_relu, norm_axis=norm_axis)

    cost = pl.CostEstimate(
        flops=int(2 * N * P * K * Cout),
        transcendentals=int(N * Cout) if do_norm else 0,
        bytes_accessed=int(patches_T.size * 2 + w_T.size * 2
                           + bias.size * 4 + N * P * Cout * 4))

    # Raise the scoped-VMEM cap only when the per-sample working set (double-
    # buffered patch/out blocks + weights + f32 norm temporaries) needs it.
    vmem_need = 2 * (K * P * 2 + P * Cout * 4 + Cout * K * 2) + 4 * P * Cout * 4
    cp_kwargs = dict(dimension_semantics=("parallel",))
    if vmem_need > (24 << 20):
        cp_kwargs["vmem_limit_bytes"] = int(min(vmem_need * 3 // 2, 100 << 20))

    out = pl.pallas_call(
        kernel,
        out_shape=jax.ShapeDtypeStruct(out_shape, jnp.float32),
        grid_spec=pltpu.PrefetchScalarGridSpec(
            num_scalar_prefetch=0,
            grid=(N,),
            in_specs=[a_spec, b_spec, bias_spec],
            out_specs=out_spec),
        compiler_params=pltpu.CompilerParams(**cp_kwargs),
        cost_estimate=cost,
    )(a, bmat, bias)

    if use_transposed:
        return out.reshape(N, Cout, OH, OW)                       # already NCHW
    return jnp.transpose(out, (0, 2, 1)).reshape(N, Cout, OH, OW)


# ----------------------------- model wrapper -------------------------------- #

# (stride, do_norm, do_relu) per layer, kernel_size=4, padding=1 everywhere.
LAYER_CFG = [
    (2, False, True),
    (2, True, True),
    (2, True, True),
    (1, True, True),
    (1, False, False),
]


def init_params(key, in_channels, nchan_first):
    """Deterministic synthetic parameters, PyTorch OIHW layout per layer."""
    chans = [in_channels, nchan_first, nchan_first * 2,
             nchan_first * 4, nchan_first * 8, 1]
    params = []
    for i in range(5):
        key, kw_, kb_ = jax.random.split(key, 3)
        cout, cin = chans[i + 1], chans[i]
        w = 0.05 * jax.random.normal(kw_, (cout, cin, 4, 4), jnp.float32)
        b = 0.10 * jax.random.normal(kb_, (cout,), jnp.float32)
        params.append((w, b))
    return params


def discriminator_forward(x_nchw, params):
    """Full discriminator forward.  Input/output in NCHW like PyTorch."""
    x = x_nchw
    for (w, b), (s, dn, dr) in zip(params, LAYER_CFG):
        x = conv_block(x, w, b, stride=s, pad=1, do_norm=dn, do_relu=dr)
    return x


# ------------------------- pure-JAX reference check ------------------------ #

def _ref_layer(x, w, b, *, stride, do_norm, do_relu):
    """Reference conv block with the same bf16-input / f32-accum contract."""
    y = lax.conv_general_dilated(
        x.astype(jnp.bfloat16), w.astype(jnp.bfloat16),
        window_strides=(stride, stride), padding=[(1, 1), (1, 1)],
        dimension_numbers=("NCHW", "OIHW", "NCHW"),
        preferred_element_type=jnp.float32)
    y = y + b.reshape(1, -1, 1, 1)
    if do_norm:
        mean = jnp.mean(y, axis=(2, 3), keepdims=True)
        var = jnp.mean(jnp.square(y - mean), axis=(2, 3), keepdims=True)
        y = (y - mean) * lax.rsqrt(var + 1e-5)
    if do_relu:
        y = jnp.where(y >= 0, y, 0.2 * y)
    return y


if __name__ == "__main__":
    key = jax.random.PRNGKey(0)
    k_x, k_p = jax.random.split(key)

    in_channels = 3
    nchan_first = 8
    x = jax.random.normal(k_x, (2, in_channels, 32, 32), jnp.float32)  # NCHW
    params = init_params(k_p, in_channels, nchan_first)

    # End-to-end forward through the Pallas kernels.
    out = jax.block_until_ready(jax.jit(discriminator_forward)(x, params))
    assert out.shape == (2, 1, 2, 2), out.shape

    # Per-layer correctness check: each fused kernel vs. a lax.conv reference
    # using the identical bf16-input / f32-accumulation contract.
    act = x
    for (w, b), (s, dn, dr) in zip(params, LAYER_CFG):
        y_k = jax.block_until_ready(
            conv_block(act, w, b, stride=s, pad=1, do_norm=dn, do_relu=dr))
        y_r = _ref_layer(act, w, b, stride=s, do_norm=dn, do_relu=dr)
        max_err = float(jnp.max(jnp.abs(y_k - y_r)))
        assert jnp.allclose(y_k, y_r, atol=1e-3, rtol=1e-3), max_err
        act = y_k
    assert act.shape == out.shape

    print("KERNEL_OK")
</pallas_src>

<mosaic_0001>
module attributes {stable_mosaic.version = 11 : i64} {
  func.func @_conv_block_kernel(%arg0: i32, %arg1: memref<8x48xbf16, #tpu.memory_space<vmem>>, %arg2: memref<1x48x256xbf16, #tpu.memory_space<vmem>>, %arg3: memref<8x1xf32, #tpu.memory_space<vmem>>, %arg4: memref<1x8x256xf32, #tpu.memory_space<vmem>>) attributes {dimension_semantics = [#tpu.dimension_semantics<parallel>], iteration_bounds = array<i64: 2>, scalar_prefetch = 0 : i64, scratch_operands = 0 : i64, tpu.core_type = #tpu.core_type<tc>, window_params = [{pipeline_mode = #tpu.pipeline_mode<synchronous>, transform_indices = @transform_0, window_bounds = array<i64: 8, 48>}, {transform_indices = @transform_1, window_bounds = array<i64: 1, 48, 256>}, {pipeline_mode = #tpu.pipeline_mode<synchronous>, transform_indices = @transform_2, window_bounds = array<i64: 8, 1>}, {transform_indices = @transform_3, window_bounds = array<i64: 1, 8, 256>}]} {
    %c0 = arith.constant 0 : index
    %c0_0 = arith.constant 0 : index
    %0 = vector.load %arg1[%c0, %c0_0] : memref<8x48xbf16, #tpu.memory_space<vmem>>, vector<8x48xbf16>
    %c0_1 = arith.constant 0 : index
    %c0_2 = arith.constant 0 : index
    %c0_3 = arith.constant 0 : index
    %1 = vector.load %arg2[%c0_1, %c0_2, %c0_3] : memref<1x48x256xbf16, #tpu.memory_space<vmem>>, vector<1x48x256xbf16>
    %2 = vector.shape_cast %1 : vector<1x48x256xbf16> to vector<48x256xbf16>
    %cst = arith.constant dense<0.000000e+00> : vector<8x256xf32>
    %3 = tpu.matmul %0, %2, %cst {dimension_numbers = #tpu.dot_dimension_numbers<[1], [0], [0], [1], [0, 0, 1, 1], [], []>} : vector<8x48xbf16>, vector<48x256xbf16>, vector<8x256xf32> -> vector<8x256xf32>
    %c0_4 = arith.constant 0 : index
    %c0_5 = arith.constant 0 : index
    %4 = vector.load %arg3[%c0_4, %c0_5] : memref<8x1xf32, #tpu.memory_space<vmem>>, vector<8x1xf32>
    %5 = vector.broadcast %4 : vector<8x1xf32> to vector<8x256xf32>
    %6 = arith.addf %3, %5 : vector<8x256xf32>
    %cst_6 = arith.constant 0.000000e+00 : f32
    %7 = vector.broadcast %cst_6 : f32 to vector<8x256xf32>
    %8 = arith.cmpf oge, %6, %7 : vector<8x256xf32>
    %cst_7 = arith.constant 2.000000e-01 : f32
    %9 = vector.broadcast %cst_7 : f32 to vector<8x256xf32>
    %10 = arith.mulf %9, %6 : vector<8x256xf32>
    %11 = arith.select %8, %6, %10 : vector<8x256xi1>, vector<8x256xf32>
    %c0_8 = arith.constant 0 : index
    %c0_9 = arith.constant 0 : index
    %c0_10 = arith.constant 0 : index
    %12 = vector.load %arg4[%c0_8, %c0_9, %c0_10] : memref<1x8x256xf32, #tpu.memory_space<vmem>>, vector<1x8x256xf32>
    %13 = vector.shape_cast %12 : vector<1x8x256xf32> to vector<8x256xf32>
    %14 = vector.shape_cast %11 : vector<8x256xf32> to vector<1x8x256xf32>
    tpu.vector_store %arg4[%c0_8, %c0_9, %c0_10], %14 {strides = array<i32>} : memref<1x8x256xf32, #tpu.memory_space<vmem>>, vector<1x8x256xf32>,
    return
  }
  func.func @transform_0(%arg0: i32) -> (i32, i32) {
    %c0_i32 = arith.constant 0 : i32
    %c0_i32_0 = arith.constant 0 : i32
    %c0_i32_1 = arith.constant 0 : i32
    return %c0_i32, %c0_i32_0 : i32, i32
  }
  func.func @transform_1(%arg0: i32) -> (i32, i32, i32) {
    %c0_i32 = arith.constant 0 : i32
    %c0_i32_0 = arith.constant 0 : i32
    %c0_i32_1 = arith.constant 0 : i32
    return %arg0, %c0_i32, %c0_i32_0 : i32, i32, i32
  }
  func.func @transform_2(%arg0: i32) -> (i32, i32) {
    %c0_i32 = arith.constant 0 : i32
    %c0_i32_0 = arith.constant 0 : i32
    %c0_i32_1 = arith.constant 0 : i32
    return %c0_i32, %c0_i32_0 : i32, i32
  }
  func.func @transform_3(%arg0: i32) -> (i32, i32, i32) {
    %c0_i32 = arith.constant 0 : i32
    %c0_i32_0 = arith.constant 0 : i32
    %c0_i32_1 = arith.constant 0 : i32
    return %arg0, %c0_i32, %c0_i32_0 : i32, i32, i32
  }
}

module attributes {stable_mosaic.version = 11 : i64} {
  func.func @_conv_block_kernel(%arg0: i32, %arg1: memref<16x128xbf16, #tpu.memory_space<vmem>>, %arg2: memref<1x128x64xbf16, #tpu.memory_space<vmem>>, %arg3: memref<16x1xf32, #tpu.memory_space<vmem>>, %arg4: memref<1x16x64xf32, #tpu.memory_space<vmem>>) attributes {dimension_semantics = [#tpu.dimension_semantics<parallel>], iteration_bounds = array<i64: 2>, scalar_prefetch = 0 : i64, scratch_operands = 0 : i64, tpu.core_type = #tpu.core_type<tc>, window_params = [{pipeline_mode = #tpu.pipeline_mode<synchronous>, transform_indices = @transform_0, window_bounds = array<i64: 16, 128>}, {transform_indices = @transform_1, window_bounds = array<i64: 1, 128, 64>}, {pipeline_mode = #tpu.pipeline_mode<synchronous>, transform_indices = @transform_2, window_bounds = array<i64: 16, 1>}, {transform_indices = @transform_3, window_bounds = array<i64: 1, 16, 64>}]} {
    %c0 = arith.constant 0 : index
    %c0_0 = arith.constant 0 : index
    %0 = vector.load %arg1[%c0, %c0_0] : memref<16x128xbf16, #tpu.memory_space<vmem>>, vector<16x128xbf16>
    %c0_1 = arith.constant 0 : index
    %c0_2 = arith.constant 0 : index
    %c0_3 = arith.constant 0 : index
    %1 = vector.load %arg2[%c0_1, %c0_2, %c0_3] : memref<1x128x64xbf16, #tpu.memory_space<vmem>>, vector<1x128x64xbf16>
    %2 = vector.shape_cast %1 : vector<1x128x64xbf16> to vector<128x64xbf16>
    %cst = arith.constant dense<0.000000e+00> : vector<16x64xf32>
    %3 = tpu.matmul %0, %2, %cst {dimension_numbers = #tpu.dot_dimension_numbers<[1], [0], [0], [1], [0, 0, 1, 1], [], []>} : vector<16x128xbf16>, vector<128x64xbf16>, vector<16x64xf32> -> vector<16x64xf32>
    %c0_4 = arith.constant 0 : index
    %c0_5 = arith.constant 0 : index
    %4 = vector.load %arg3[%c0_4, %c0_5] : memref<16x1xf32, #tpu.memory_space<vmem>>, vector<16x1xf32>
    %5 = vector.broadcast %4 : vector<16x1xf32> to vector<16x64xf32>
    %6 = arith.addf %3, %5 : vector<16x64xf32>
    %cst_6 = arith.constant dense<0.000000e+00> : vector<16xf32>
    %7 = vector.multi_reduction <add>, %6, %cst_6 [1] : vector<16x64xf32> to vector<16xf32>
    %8 = vector.shape_cast %7 : vector<16xf32> to vector<16x1xf32>
    %cst_7 = arith.constant 6.400000e+01 : f32
    %9 = vector.broadcast %cst_7 : f32 to vector<16x1xf32>
    %10 = arith.divf %8, %9 : vector<16x1xf32>
    %11 = vector.broadcast %10 : vector<16x1xf32> to vector<16x64xf32>
    %12 = arith.subf %6, %11 : vector<16x64xf32>
    %13 = arith.mulf %12, %12 : vector<16x64xf32>
    %cst_8 = arith.constant dense<0.000000e+00> : vector<16xf32>
    %14 = vector.multi_reduction <add>, %13, %cst_8 [1] : vector<16x64xf32> to vector<16xf32>
    %15 = vector.shape_cast %14 : vector<16xf32> to vector<16x1xf32>
    %cst_9 = arith.constant 6.400000e+01 : f32
    %16 = vector.broadcast %cst_9 : f32 to vector<16x1xf32>
    %17 = arith.divf %15, %16 : vector<16x1xf32>
    %18 = vector.broadcast %10 : vector<16x1xf32> to vector<16x64xf32>
    %19 = arith.subf %6, %18 : vector<16x64xf32>
    %cst_10 = arith.constant 9.99999974E-6 : f32
    %20 = vector.broadcast %cst_10 : f32 to vector<16x1xf32>
    %21 = arith.addf %17, %20 : vector<16x1xf32>
    %22 = math.rsqrt %21 : vector<16x1xf32>
    %23 = vector.broadcast %22 : vector<16x1xf32> to vector<16x64xf32>
    %24 = arith.mulf %19, %23 : vector<16x64xf32>
    %cst_11 = arith.constant 0.000000e+00 : f32
    %25 = vector.broadcast %cst_11 : f32 to vector<16x64xf32>
    %26 = arith.cmpf oge, %24, %25 : vector<16x64xf32>
    %cst_12 = arith.constant 2.000000e-01 : f32
    %27 = vector.broadcast %cst_12 : f32 to vector<16x64xf32>
    %28 = arith.mulf %27, %24 : vector<16x64xf32>
    %29 = arith.select %26, %24, %28 : vector<16x64xi1>, vector<16x64xf32>
    %c0_13 = arith.constant 0 : index
    %c0_14 = arith.constant 0 : index
    %c0_15 = arith.constant 0 : index
    %30 = vector.load %arg4[%c0_13, %c0_14, %c0_15] : memref<1x16x64xf32, #tpu.memory_space<vmem>>, vector<1x16x64xf32>
    %31 = vector.shape_cast %30 : vector<1x16x64xf32> to vector<16x64xf32>
    %32 = vector.shape_cast %29 : vector<16x64xf32> to vector<1x16x64xf32>
    tpu.vector_store %arg4[%c0_13, %c0_14, %c0_15], %32 {strides = array<i32>} : memref<1x16x64xf32, #tpu.memory_space<vmem>>, vector<1x16x64xf32>,
    return
  }
  func.func @transform_0(%arg0: i32) -> (i32, i32) {
    %c0_i32 = arith.constant 0 : i32
    %c0_i32_0 = arith.constant 0 : i32
    %c0_i32_1 = arith.constant 0 : i32
    return %c0_i32, %c0_i32_0 : i32, i32
  }
  func.func @transform_1(%arg0: i32) -> (i32, i32, i32) {
    %c0_i32 = arith.constant 0 : i32
    %c0_i32_0 = arith.constant 0 : i32
    %c0_i32_1 = arith.constant 0 : i32
    return %arg0, %c0_i32, %c0_i32_0 : i32, i32, i32
  }
  func.func @transform_2(%arg0: i32) -> (i32, i32) {
    %c0_i32 = arith.constant 0 : i32
    %c0_i32_0 = arith.constant 0 : i32
    %c0_i32_1 = arith.constant 0 : i32
    return %c0_i32, %c0_i32_0 : i32, i32
  }
  func.func @transform_3(%arg0: i32) -> (i32, i32, i32) {
    %c0_i32 = arith.constant 0 : i32
    %c0_i32_0 = arith.constant 0 : i32
    %c0_i32_1 = arith.constant 0 : i32
    return %arg0, %c0_i32, %c0_i32_0 : i32, i32, i32
  }
}

module attributes {stable_mosaic.version = 11 : i64} {
  func.func @_conv_block_kernel(%arg0: i32, %arg1: memref<1x16x256xbf16, #tpu.memory_space<vmem>>, %arg2: memref<256x32xbf16, #tpu.memory_space<vmem>>, %arg3: memref<1x32xf32, #tpu.memory_space<vmem>>, %arg4: memref<1x16x32xf32, #tpu.memory_space<vmem>>) attributes {dimension_semantics = [#tpu.dimension_semantics<parallel>], iteration_bounds = array<i64: 2>, scalar_prefetch = 0 : i64, scratch_operands = 0 : i64, tpu.core_type = #tpu.core_type<tc>, window_params = [{transform_indices = @transform_0, window_bounds = array<i64: 1, 16, 256>}, {pipeline_mode = #tpu.pipeline_mode<synchronous>, transform_indices = @transform_1, window_bounds = array<i64: 256, 32>}, {pipeline_mode = #tpu.pipeline_mode<synchronous>, transform_indices = @transform_2, window_bounds = array<i64: 1, 32>}, {transform_indices = @transform_3, window_bounds = array<i64: 1, 16, 32>}]} {
    %c0 = arith.constant 0 : index
    %c0_0 = arith.constant 0 : index
    %c0_1 = arith.constant 0 : index
    %0 = vector.load %arg1[%c0, %c0_0, %c0_1] : memref<1x16x256xbf16, #tpu.memory_space<vmem>>, vector<1x16x256xbf16>
    %1 = vector.shape_cast %0 : vector<1x16x256xbf16> to vector<16x256xbf16>
    %c0_2 = arith.constant 0 : index
    %c0_3 = arith.constant 0 : index
    %2 = vector.load %arg2[%c0_2, %c0_3] : memref<256x32xbf16, #tpu.memory_space<vmem>>, vector<256x32xbf16>
    %cst = arith.constant dense<0.000000e+00> : vector<16x32xf32>
    %3 = tpu.matmul %1, %2, %cst {dimension_numbers = #tpu.dot_dimension_numbers<[1], [0], [0], [1], [0, 0, 1, 1], [], []>} : vector<16x256xbf16>, vector<256x32xbf16>, vector<16x32xf32> -> vector<16x32xf32>
    %c0_4 = arith.constant 0 : index
    %c0_5 = arith.constant 0 : index
    %4 = vector.load %arg3[%c0_4, %c0_5] : memref<1x32xf32, #tpu.memory_space<vmem>>, vector<1x32xf32>
    %5 = vector.broadcast %4 : vector<1x32xf32> to vector<16x32xf32>
    %6 = arith.addf %3, %5 : vector<16x32xf32>
    %cst_6 = arith.constant dense<0.000000e+00> : vector<32xf32>
    %7 = vector.multi_reduction <add>, %6, %cst_6 [0] : vector<16x32xf32> to vector<32xf32>
    %8 = vector.shape_cast %7 : vector<32xf32> to vector<1x32xf32>
    %cst_7 = arith.constant 1.600000e+01 : f32
    %9 = vector.broadcast %cst_7 : f32 to vector<1x32xf32>
    %10 = arith.divf %8, %9 : vector<1x32xf32>
    %11 = vector.broadcast %10 : vector<1x32xf32> to vector<16x32xf32>
    %12 = arith.subf %6, %11 : vector<16x32xf32>
    %13 = arith.mulf %12, %12 : vector<16x32xf32>
    %cst_8 = arith.constant dense<0.000000e+00> : vector<32xf32>
    %14 = vector.multi_reduction <add>, %13, %cst_8 [0] : vector<16x32xf32> to vector<32xf32>
    %15 = vector.shape_cast %14 : vector<32xf32> to vector<1x32xf32>
    %cst_9 = arith.constant 1.600000e+01 : f32
    %16 = vector.broadcast %cst_9 : f32 to vector<1x32xf32>
    %17 = arith.divf %15, %16 : vector<1x32xf32>
    %18 = vector.broadcast %10 : vector<1x32xf32> to vector<16x32xf32>
    %19 = arith.subf %6, %18 : vector<16x32xf32>
    %cst_10 = arith.constant 9.99999974E-6 : f32
    %20 = vector.broadcast %cst_10 : f32 to vector<1x32xf32>
    %21 = arith.addf %17, %20 : vector<1x32xf32>
    %22 = math.rsqrt %21 : vector<1x32xf32>
    %23 = vector.broadcast %22 : vector<1x32xf32> to vector<16x32xf32>
    %24 = arith.mulf %19, %23 : vector<16x32xf32>
    %cst_11 = arith.constant 0.000000e+00 : f32
    %25 = vector.broadcast %cst_11 : f32 to vector<16x32xf32>
    %26 = arith.cmpf oge, %24, %25 : vector<16x32xf32>
    %cst_12 = arith.constant 2.000000e-01 : f32
    %27 = vector.broadcast %cst_12 : f32 to vector<16x32xf32>
    %28 = arith.mulf %27, %24 : vector<16x32xf32>
    %29 = arith.select %26, %24, %28 : vector<16x32xi1>, vector<16x32xf32>
    %c0_13 = arith.constant 0 : index
    %c0_14 = arith.constant 0 : index
    %c0_15 = arith.constant 0 : index
    %30 = vector.load %arg4[%c0_13, %c0_14, %c0_15] : memref<1x16x32xf32, #tpu.memory_space<vmem>>, vector<1x16x32xf32>
    %31 = vector.shape_cast %30 : vector<1x16x32xf32> to vector<16x32xf32>
    %32 = vector.shape_cast %29 : vector<16x32xf32> to vector<1x16x32xf32>
    tpu.vector_store %arg4[%c0_13, %c0_14, %c0_15], %32 {strides = array<i32>} : memref<1x16x32xf32, #tpu.memory_space<vmem>>, vector<1x16x32xf32>,
    return
  }
  func.func @transform_0(%arg0: i32) -> (i32, i32, i32) {
    %c0_i32 = arith.constant 0 : i32
    %c0_i32_0 = arith.constant 0 : i32
    %c0_i32_1 = arith.constant 0 : i32
    return %arg0, %c0_i32, %c0_i32_0 : i32, i32, i32
  }
  func.func @transform_1(%arg0: i32) -> (i32, i32) {
    %c0_i32 = arith.constant 0 : i32
    %c0_i32_0 = arith.constant 0 : i32
    %c0_i32_1 = arith.constant 0 : i32
    return %c0_i32, %c0_i32_0 : i32, i32
  }
  func.func @transform_2(%arg0: i32) -> (i32, i32) {
    %c0_i32 = arith.constant 0 : i32
    %c0_i32_0 = arith.constant 0 : i32
    %c0_i32_1 = arith.constant 0 : i32
    return %c0_i32, %c0_i32_0 : i32, i32
  }
  func.func @transform_3(%arg0: i32) -> (i32, i32, i32) {
    %c0_i32 = arith.constant 0 : i32
    %c0_i32_0 = arith.constant 0 : i32
    %c0_i32_1 = arith.constant 0 : i32
    return %arg0, %c0_i32, %c0_i32_0 : i32, i32, i32
  }
}

module attributes {stable_mosaic.version = 11 : i64} {
  func.func @_conv_block_kernel(%arg0: i32, %arg1: memref<1x9x512xbf16, #tpu.memory_space<vmem>>, %arg2: memref<512x64xbf16, #tpu.memory_space<vmem>>, %arg3: memref<1x64xf32, #tpu.memory_space<vmem>>, %arg4: memref<1x9x64xf32, #tpu.memory_space<vmem>>) attributes {dimension_semantics = [#tpu.dimension_semantics<parallel>], iteration_bounds = array<i64: 2>, scalar_prefetch = 0 : i64, scratch_operands = 0 : i64, tpu.core_type = #tpu.core_type<tc>, window_params = [{transform_indices = @transform_0, window_bounds = array<i64: 1, 9, 512>}, {pipeline_mode = #tpu.pipeline_mode<synchronous>, transform_indices = @transform_1, window_bounds = array<i64: 512, 64>}, {pipeline_mode = #tpu.pipeline_mode<synchronous>, transform_indices = @transform_2, window_bounds = array<i64: 1, 64>}, {transform_indices = @transform_3, window_bounds = array<i64: 1, 9, 64>}]} {
    %c0 = arith.constant 0 : index
    %c0_0 = arith.constant 0 : index
    %c0_1 = arith.constant 0 : index
    %0 = vector.load %arg1[%c0, %c0_0, %c0_1] : memref<1x9x512xbf16, #tpu.memory_space<vmem>>, vector<1x9x512xbf16>
    %1 = vector.shape_cast %0 : vector<1x9x512xbf16> to vector<9x512xbf16>
    %c0_2 = arith.constant 0 : index
    %c0_3 = arith.constant 0 : index
    %2 = vector.load %arg2[%c0_2, %c0_3] : memref<512x64xbf16, #tpu.memory_space<vmem>>, vector<512x64xbf16>
    %cst = arith.constant dense<0.000000e+00> : vector<9x64xf32>
    %3 = tpu.matmul %1, %2, %cst {dimension_numbers = #tpu.dot_dimension_numbers<[1], [0], [0], [1], [0, 0, 1, 1], [], []>} : vector<9x512xbf16>, vector<512x64xbf16>, vector<9x64xf32> -> vector<9x64xf32>
    %c0_4 = arith.constant 0 : index
    %c0_5 = arith.constant 0 : index
    %4 = vector.load %arg3[%c0_4, %c0_5] : memref<1x64xf32, #tpu.memory_space<vmem>>, vector<1x64xf32>
    %5 = vector.broadcast %4 : vector<1x64xf32> to vector<9x64xf32>
    %6 = arith.addf %3, %5 : vector<9x64xf32>
    %cst_6 = arith.constant dense<0.000000e+00> : vector<64xf32>
    %7 = vector.multi_reduction <add>, %6, %cst_6 [0] : vector<9x64xf32> to vector<64xf32>
    %8 = vector.shape_cast %7 : vector<64xf32> to vector<1x64xf32>
    %cst_7 = arith.constant 9.000000e+00 : f32
    %9 = vector.broadcast %cst_7 : f32 to vector<1x64xf32>
    %10 = arith.divf %8, %9 : vector<1x64xf32>
    %11 = vector.broadcast %10 : vector<1x64xf32> to vector<9x64xf32>
    %12 = arith.subf %6, %11 : vector<9x64xf32>
    %13 = arith.mulf %12, %12 : vector<9x64xf32>
    %cst_8 = arith.constant dense<0.000000e+00> : vector<64xf32>
    %14 = vector.multi_reduction <add>, %13, %cst_8 [0] : vector<9x64xf32> to vector<64xf32>
    %15 = vector.shape_cast %14 : vector<64xf32> to vector<1x64xf32>
    %cst_9 = arith.constant 9.000000e+00 : f32
    %16 = vector.broadcast %cst_9 : f32 to vector<1x64xf32>
    %17 = arith.divf %15, %16 : vector<1x64xf32>
    %18 = vector.broadcast %10 : vector<1x64xf32> to vector<9x64xf32>
    %19 = arith.subf %6, %18 : vector<9x64xf32>
    %cst_10 = arith.constant 9.99999974E-6 : f32
    %20 = vector.broadcast %cst_10 : f32 to vector<1x64xf32>
    %21 = arith.addf %17, %20 : vector<1x64xf32>
    %22 = math.rsqrt %21 : vector<1x64xf32>
    %23 = vector.broadcast %22 : vector<1x64xf32> to vector<9x64xf32>
    %24 = arith.mulf %19, %23 : vector<9x64xf32>
    %cst_11 = arith.constant 0.000000e+00 : f32
    %25 = vector.broadcast %cst_11 : f32 to vector<9x64xf32>
    %26 = arith.cmpf oge, %24, %25 : vector<9x64xf32>
    %cst_12 = arith.constant 2.000000e-01 : f32
    %27 = vector.broadcast %cst_12 : f32 to vector<9x64xf32>
    %28 = arith.mulf %27, %24 : vector<9x64xf32>
    %29 = arith.select %26, %24, %28 : vector<9x64xi1>, vector<9x64xf32>
    %c0_13 = arith.constant 0 : index
    %c0_14 = arith.constant 0 : index
    %c0_15 = arith.constant 0 : index
    %30 = vector.load %arg4[%c0_13, %c0_14, %c0_15] : memref<1x9x64xf32, #tpu.memory_space<vmem>>, vector<1x9x64xf32>
    %31 = vector.shape_cast %30 : vector<1x9x64xf32> to vector<9x64xf32>
    %32 = vector.shape_cast %29 : vector<9x64xf32> to vector<1x9x64xf32>
    tpu.vector_store %arg4[%c0_13, %c0_14, %c0_15], %32 {strides = array<i32>} : memref<1x9x64xf32, #tpu.memory_space<vmem>>, vector<1x9x64xf32>,
    return
  }
  func.func @transform_0(%arg0: i32) -> (i32, i32, i32) {
    %c0_i32 = arith.constant 0 : i32
    %c0_i32_0 = arith.constant 0 : i32
    %c0_i32_1 = arith.constant 0 : i32
    return %arg0, %c0_i32, %c0_i32_0 : i32, i32, i32
  }
  func.func @transform_1(%arg0: i32) -> (i32, i32) {
    %c0_i32 = arith.constant 0 : i32
    %c0_i32_0 = arith.constant 0 : i32
    %c0_i32_1 = arith.constant 0 : i32
    return %c0_i32, %c0_i32_0 : i32, i32
  }
  func.func @transform_2(%arg0: i32) -> (i32, i32) {
    %c0_i32 = arith.constant 0 : i32
    %c0_i32_0 = arith.constant 0 : i32
    %c0_i32_1 = arith.constant 0 : i32
    return %c0_i32, %c0_i32_0 : i32, i32
  }
  func.func @transform_3(%arg0: i32) -> (i32, i32, i32) {
    %c0_i32 = arith.constant 0 : i32
    %c0_i32_0 = arith.constant 0 : i32
    %c0_i32_1 = arith.constant 0 : i32
    return %arg0, %c0_i32, %c0_i32_0 : i32, i32, i32
  }
}

module attributes {stable_mosaic.version = 11 : i64} {
  func.func @_conv_block_kernel(%arg0: i32, %arg1: memref<1x1024xbf16, #tpu.memory_space<vmem>>, %arg2: memref<1x1024x4xbf16, #tpu.memory_space<vmem>>, %arg3: memref<1x1xf32, #tpu.memory_space<vmem>>, %arg4: memref<1x1x4xf32, #tpu.memory_space<vmem>>) attributes {dimension_semantics = [#tpu.dimension_semantics<parallel>], iteration_bounds = array<i64: 2>, scalar_prefetch = 0 : i64, scratch_operands = 0 : i64, tpu.core_type = #tpu.core_type<tc>, window_params = [{pipeline_mode = #tpu.pipeline_mode<synchronous>, transform_indices = @transform_0, window_bounds = array<i64: 1, 1024>}, {transform_indices = @transform_1, window_bounds = array<i64: 1, 1024, 4>}, {pipeline_mode = #tpu.pipeline_mode<synchronous>, transform_indices = @transform_2, window_bounds = array<i64: 1, 1>}, {transform_indices = @transform_3, window_bounds = array<i64: 1, 1, 4>}]} {
    %c0 = arith.constant 0 : index
    %c0_0 = arith.constant 0 : index
    %0 = vector.load %arg1[%c0, %c0_0] : memref<1x1024xbf16, #tpu.memory_space<vmem>>, vector<1x1024xbf16>
    %c0_1 = arith.constant 0 : index
    %c0_2 = arith.constant 0 : index
    %c0_3 = arith.constant 0 : index
    %1 = vector.load %arg2[%c0_1, %c0_2, %c0_3] : memref<1x1024x4xbf16, #tpu.memory_space<vmem>>, vector<1x1024x4xbf16>
    %2 = vector.shape_cast %1 : vector<1x1024x4xbf16> to vector<1024x4xbf16>
    %cst = arith.constant dense<0.000000e+00> : vector<1x4xf32>
    %3 = tpu.matmul %0, %2, %cst {dimension_numbers = #tpu.dot_dimension_numbers<[1], [0], [0], [1], [0, 0, 1, 1], [], []>} : vector<1x1024xbf16>, vector<1024x4xbf16>, vector<1x4xf32> -> vector<1x4xf32>
    %c0_4 = arith.constant 0 : index
    %c0_5 = arith.constant 0 : index
    %4 = vector.load %arg3[%c0_4, %c0_5] : memref<1x1xf32, #tpu.memory_space<vmem>>, vector<1x1xf32>
    %5 = vector.broadcast %4 : vector<1x1xf32> to vector<1x4xf32>
    %6 = arith.addf %3, %5 : vector<1x4xf32>
    %c0_6 = arith.constant 0 : index
    %c0_7 = arith.constant 0 : index
    %c0_8 = arith.constant 0 : index
    %7 = vector.load %arg4[%c0_6, %c0_7, %c0_8] : memref<1x1x4xf32, #tpu.memory_space<vmem>>, vector<1x1x4xf32>
    %8 = vector.shape_cast %7 : vector<1x1x4xf32> to vector<1x4xf32>
    %9 = vector.shape_cast %6 : vector<1x4xf32> to vector<1x1x4xf32>
    tpu.vector_store %arg4[%c0_6, %c0_7, %c0_8], %9 {strides = array<i32>} : memref<1x1x4xf32, #tpu.memory_space<vmem>>, vector<1x1x4xf32>,
    return
  }
  func.func @transform_0(%arg0: i32) -> (i32, i32) {
    %c0_i32 = arith.constant 0 : i32
    %c0_i32_0 = arith.constant 0 : i32
    %c0_i32_1 = arith.constant 0 : i32
    return %c0_i32, %c0_i32_0 : i32, i32
  }
  func.func @transform_1(%arg0: i32) -> (i32, i32, i32) {
    %c0_i32 = arith.constant 0 : i32
    %c0_i32_0 = arith.constant 0 : i32
    %c0_i32_1 = arith.constant 0 : i32
    return %arg0, %c0_i32, %c0_i32_0 : i32, i32, i32
  }
  func.func @transform_2(%arg0: i32) -> (i32, i32) {
    %c0_i32 = arith.constant 0 : i32
    %c0_i32_0 = arith.constant 0 : i32
    %c0_i32_1 = arith.constant 0 : i32
    return %c0_i32, %c0_i32_0 : i32, i32
  }
  func.func @transform_3(%arg0: i32) -> (i32, i32, i32) {
    %c0_i32 = arith.constant 0 : i32
    %c0_i32_0 = arith.constant 0 : i32
    %c0_i32_1 = arith.constant 0 : i32
    return %arg0, %c0_i32, %c0_i32_0 : i32, i32, i32
  }
}

</mosaic_0001>

<llo_original>
// kernel: discriminator_forward.5
$region0: #{discriminator_forward.5}
  #allocation0 [shape = 'u32[]', space=smem, size = 0x4, offset = 0x4, fixed_abs, tag = 'smem constant byte address 0x4 - core index']
  #allocation1 [shape = 'u32[144,128]{1,0:T(1,128)}', space=vmem, size = 0x12000, scoped, tag = 'internal scratch']
  %s0 = inlined_call_operand.vmem [shape: bf16[8,48], index: 0, kind: input, shape index: {}]
  %s1 = inlined_call_operand.vmem [shape: bf16[2,48,256], index: 1, kind: input, shape index: {}]
  %s2 = inlined_call_operand.vmem [shape: f32[8,1], index: 2, kind: input, shape index: {}]
  %s3 = inlined_call_operand.vmem [shape: f32[2,8,256], index: 3, kind: output, shape index: {}]
  %s4 = sld [smem:[#allocation0]]
  $region45: #{discriminator_forward.5} parent=0
    _
  %s6 = ssub.s32 1, %s4
  %s7 = scalar_select 0, %s6, %s4
  loop: start=0, step=1, limit=4
  $region2: #{discriminator_forward.5} parent=0 // loop_pre_header
    _
  $region3: #{discriminator_forward.5} parent=0 // loop_header
    %s9 = sphi 0, %s13
    %p10 = scmp.ge.s32.totalorder %s9, 4
    %s17 = sphi 0, %s17
    %s19 = sphi 0, %s17
    %s20 = sphi 0, %s19
    %s34 = sphi 0, %s20
    %s40 = sphi 0, %s42
    %s43 = sphi 0, %s40
    %s44 = sphi 0, %s43
    %s60 = sphi 0, %s44
    %s64 = sphi 0, %s64
    %s66 = sphi 0, %s64
    %s67 = sphi 0, %s66
    %s81 = sphi 0, %s67
    %s87 = sphi 0, %s89
    %s90 = sphi 0, %s87
    %s91 = sphi 0, %s90
    %s107 = sphi 0, %s91
  $region4: #{discriminator_forward.5} parent=0 // loop_header_branch
    %12 = sbr.rel (%p10) target = $region8
  $region5: #{discriminator_forward.5} parent=0 // loop_body
    %s14 = ssub.s32 %s9, 1
    %s15 = ssub.s32 %s9, 2
    %s16 = sadd.s32 %s9, 1
    %s18 = sadd.s32 %s17, 1
    %p21 = scmp.eq.s32.totalorder %s9, 1
    %p22 = scmp.ne.s32.totalorder %s17, %s19
    %p23 = scmp.eq.s32.totalorder %s9, 0
    %p24 = por %p22, %p23
    %p25 = scmp.ne.s32.totalorder %s17, %s19
    %p26 = scmp.eq.s32.totalorder %s14, 1
    %p27 = por %p25, %p26
    %p28 = scmp.ne.s32.totalorder %s19, %s20
    %p29 = scmp.eq.s32.totalorder %s14, 0
    %p30 = por %p28, %p29
    %p31 = scmp.ne.s32.totalorder %s19, %s20
    %p32 = scmp.eq.s32.totalorder %s15, 1
    %p33 = por %p31, %p32
    %p35 = scmp.ne.s32.totalorder %s20, %s34
    %p36 = scmp.eq.s32.totalorder %s15, 0
    %p37 = por %p35, %p36
    %s38 = ssub.s32 %s9, %s16
    %p39 = scmp.eq.s32.totalorder %s38, 0
    %s41 = sadd.s32 %s40, 1
    %s42 = scalar_select %p39, %s40, %s41
    %p45 = pneg %p39
    %p46 = scmp.eq.s32.totalorder %s9, 1
    %p47 = por %p45, %p46
    %p48 = scmp.ne.s32.totalorder %s40, %s43
    %p49 = scmp.eq.s32.totalorder %s9, 0
    %p50 = por %p48, %p49
    %p51 = scmp.ne.s32.totalorder %s40, %s43
    %p52 = scmp.eq.s32.totalorder %s14, 1
    %p53 = por %p51, %p52
    %p54 = scmp.ne.s32.totalorder %s43, %s44
    %p55 = scmp.eq.s32.totalorder %s14, 0
    %p56 = por %p54, %p55
    %p57 = scmp.ne.s32.totalorder %s43, %s44
    %p58 = scmp.eq.s32.totalorder %s15, 1
    %p59 = por %p57, %p58
    %p61 = scmp.ne.s32.totalorder %s44, %s60
    %p62 = scmp.eq.s32.totalorder %s15, 0
    %p63 = por %p61, %p62
    %s65 = sadd.s32 %s64, 1
    %p68 = scmp.eq.s32.totalorder %s9, 1
    %p69 = scmp.ne.s32.totalorder %s64, %s66
    %p70 = scmp.eq.s32.totalorder %s9, 0
    %p71 = por %p69, %p70
    %p72 = scmp.ne.s32.totalorder %s64, %s66
    %p73 = scmp.eq.s32.totalorder %s14, 1
    %p74 = por %p72, %p73
    %p75 = scmp.ne.s32.totalorder %s66, %s67
    %p76 = scmp.eq.s32.totalorder %s14, 0
    %p77 = por %p75, %p76
    %p78 = scmp.ne.s32.totalorder %s66, %s67
    %p79 = scmp.eq.s32.totalorder %s15, 1
    %p80 = por %p78, %p79
    %p82 = scmp.ne.s32.totalorder %s67, %s81
    %p83 = scmp.eq.s32.totalorder %s15, 0
    %p84 = por %p82, %p83
    %s85 = ssub.s32 %s9, %s16
    %p86 = scmp.eq.s32.totalorder %s85, 0
    %s88 = sadd.s32 %s87, 1
    %s89 = scalar_select %p86, %s87, %s88
    %p92 = pneg %p86
    %p93 = scmp.eq.s32.totalorder %s9, 1
    %p94 = por %p92, %p93
    %p95 = scmp.ne.s32.totalorder %s87, %s90
    %p96 = scmp.eq.s32.totalorder %s9, 0
    %p97 = por %p95, %p96
    %p98 = scmp.ne.s32.totalorder %s87, %s90
    %p99 = scmp.eq.s32.totalorder %s14, 1
    %p100 = por %p98, %p99
    %p101 = scmp.ne.s32.totalorder %s90, %s91
    %p102 = scmp.eq.s32.totalorder %s14, 0
    %p103 = por %p101, %p102
    %p104 = scmp.ne.s32.totalorder %s90, %s91
    %p105 = scmp.eq.s32.totalorder %s15, 1
    %p106 = por %p104, %p105
    %p108 = scmp.ne.s32.totalorder %s91, %s107
    %p109 = scmp.eq.s32.totalorder %s15, 0
    %p110 = por %p108, %p109
    %p111 = scmp.le.s32.totalorder 1, %s9
    %p112 = scmp.lt.s32.totalorder %s9, 3
    %p113 = pnand %p111, %p112
    %p114 = pneg %p113
    // Predicated region
    $region9: #{discriminator_forward.5} parent=5 // pred_check
      _
    $region10: #{discriminator_forward.5} parent=5 // pred_check_branch
      %116 = sbr.rel (%p113) target = $region12
    $region11: #{discriminator_forward.5} parent=5 // pred_region
      %s117 = ssub.s32 %s9, 1
      // Predicated region
      $region13: #{discriminator_forward.5} parent=11 // pred_check
        %p118 = pneg %p30
      $region14: #{discriminator_forward.5} parent=11 // pred_check_branch
        %120 = sbr.rel (%p118) target = $region16
      $region15: #{discriminator_forward.5} parent=11 // pred_region
        _
      $region16: #{discriminator_forward.5} parent=11 // pred_fallthru
        _
      // Predicated region
      $region17: #{discriminator_forward.5} parent=11 // pred_check
        %p121 = pneg %p77
      $region18: #{discriminator_forward.5} parent=11 // pred_check_branch
        %123 = sbr.rel (%p121) target = $region20
      $region19: #{discriminator_forward.5} parent=11 // pred_region
        _
      $region20: #{discriminator_forward.5} parent=11 // pred_fallthru
        _
    $region12: #{discriminator_forward.5} parent=5 // pred_fallthru
      _
    %p124 = scmp.lt.s32.totalorder %s9, 2
    // Predicated region
    $region21: #{discriminator_forward.5} parent=5 // pred_check
      %p125 = pneg %p124
    $region22: #{discriminator_forward.5} parent=5 // pred_check_branch
      %127 = sbr.rel (%p125) target = $region24
    $region23: #{discriminator_forward.5} parent=5 // pred_region
      // Predicated region
      $region25: #{discriminator_forward.5} parent=23 // pred_check
        %p128 = pneg %p50
      $region26: #{discriminator_forward.5} parent=23 // pred_check_branch
        %130 = sbr.rel (%p128) target = $region28
      $region27: #{discriminator_forward.5} parent=23 // pred_region
        %p131 = scmp.lt.s32.totalorder %s9, 1
        %s132 = scalar_select %p131, %s9, 1
        %s133 = smul.addr %s132, 12
        %s134 = smul.addr %s133, 4
        %s135 = scalar_lea.vmem %s1, %s134
      $region28: #{discriminator_forward.5} parent=23 // pred_fallthru
        _
    $region24: #{discriminator_forward.5} parent=5 // pred_fallthru
      _
    %p136 = scmp.le.s32.totalorder 1, %s9
    %p137 = scmp.lt.s32.totalorder %s9, 3
    %p138 = pnand %p136, %p137
    %p139 = pneg %p138
    // Predicated region
    $region29: #{discriminator_forward.5} parent=5 // pred_check
      _
    $region30: #{discriminator_forward.5} parent=5 // pred_check_branch
      %141 = sbr.rel (%p138) target = $region32
    $region31: #{discriminator_forward.5} parent=5 // pred_region
      %s142 = ssub.s32 %s9, 1
      %p143 = pneg %p30
      %p144 = pneg %p27
      %p145 = scmp.lt.s32.totalorder %s14, 1
      %s146 = scalar_select %p145, %s14, 1
      %s147 = smul.addr %s146, 12
      %s148 = smul.addr %s147, 4
      %s149 = scalar_lea.vmem %s1, %s148
      %p150 = pneg %p56
      %p151 = pneg %p53
      %p152 = pneg %p77
      %p153 = pneg %p74
      %p154 = pneg %p103
      %p155 = pneg %p100
      %p156 = scmp.lt.s32.totalorder %s14, 1
      %s157 = scalar_select %p156, %s14, 1
      %s158 = smul.addr %s157, 2
      %s159 = smul.addr %s158, 8
      %s160 = scalar_lea.vmem %s3, %s159
      %p161 = scmp.lt.s32.totalorder %s14, 1
      %s162 = scalar_select %p161, %s14, 1
      %s163 = smul.addr %s162, 12
      %s164 = smul.addr %s163, 4
      %s165 = scalar_lea.vmem %s1, %s164
      %p166 = scmp.lt.s32.totalorder %s14, 1
      %s167 = scalar_select %p166, %s14, 1
      %s168 = smul.addr %s167, 2
      %s169 = smul.addr %s168, 8
      %s170 = scalar_lea.vmem %s3, %s169
      %v172 = vld [vmem:[%s0] sm:$0xf]
      %v173 = vld [vmem:[%s165] sm:$0xff]
      %v174 = vld [vmem:[%s165 + $0x8] sm:$0xff]
      %v175 = vld [vmem:[%s165 + $0x10] sm:$0xff]
      %v176 = vld [vmem:[%s165 + $0x18] sm:$0xff]
      %v177 = vld [vmem:[%s165 + $0x20] sm:$0xff]
      %v178 = vld [vmem:[%s165 + $0x28] sm:$0xff]
      %v179 = vld [vmem:[%s2] sm:$0xff]
      %181 = vset.pattern.permute.xlu0 0
      %182 = vperm.xlu0 %181, %v179
      %v183 = vpop.permute.xlu0 %182
      %v191 = vunpack.c.l.b16 %v173
      %v192 = vunpack.c.h.b16 %v173
      %v193 = vunpack.c.l.b16 %v174
      %v194 = vunpack.c.h.b16 %v174
      %v195 = vunpack.c.l.b16 %v175
      %v196 = vunpack.c.h.b16 %v175
      %v197 = vunpack.c.l.b16 %v176
      %v198 = vunpack.c.h.b16 %v176
      %v199 = vunpack.c.l.b16 %v177
      %v200 = vunpack.c.h.b16 %v177
      %v201 = vunpack.c.l.b16 %v178
      %v202 = vunpack.c.h.b16 %v178
      %v203 = vpack.c.b16 %v193, %v191
      %v204 = vpack.c.b16 %v194, %v192
      %v205 = vpack.c.b16 %v197, %v195
      %v206 = vpack.c.b16 %v198, %v196
      %v207 = vpack.c.b16 %v201, %v199
      %v208 = vpack.c.b16 %v202, %v200
      %vm215 = vcmask 392192
      %v217 = vsel %vm215, %v172, 0
      %219 = vmatprep.subr.bf16.mxu0 %v204
      %220 = vmatpush1.bf16.msra.mxu0 %v203
      %221 = vmatprep.subr.bf16.mxu0 %v206
      %222 = vmatpush1.bf16.msra.mxu0 %v205
      %223 = vmatprep.subr.bf16.mxu0 %v208
      %224 = vmatpush1.bf16.msra.mxu0 %v207
      %225 = vmatprep.subr.bf16.mxu0 0
      %226 = vmatpush1.bf16.msra.mxu0 0
      %227 = vmatprep.subr.bf16.mxu0 0
      %228 = vmatpush1.bf16.msra.mxu0 0
      %229 = vmatprep.subr.bf16.mxu0 0
      %230 = vmatpush1.bf16.msra.mxu0 0
      %231 = vmatprep.subr.bf16.mxu0 0
      %232 = vmatpush1.bf16.msra.mxu0 0
      %233 = vmatprep.subr.bf16.mxu0 0
      %234 = vmatpush1.bf16.msra.mxu0 0
      %235 = vmatprep.subr.bf16.mxu0 0
      %236 = vmatpush1.bf16.msra.mxu0 0
      %237 = vmatprep.subr.bf16.mxu0 0
      %238 = vmatpush1.bf16.msra.mxu0 0
      %239 = vmatprep.subr.bf16.mxu0 0
      %240 = vmatpush1.bf16.msra.mxu0 0
      %241 = vmatprep.subr.bf16.mxu0 0
      %242 = vmatpush1.bf16.msra.mxu0 0
      %243 = vmatprep.subr.bf16.mxu0 0
      %244 = vmatpush1.bf16.msra.mxu0 0
      %245 = vmatprep.subr.bf16.mxu0 0
      %246 = vmatpush1.bf16.msra.mxu0 0
      %247 = vmatprep.subr.bf16.mxu0 0
      %248 = vmatpush1.bf16.msra.mxu0 0
      %249 = vmatprep.subr.bf16.mxu0 0
      %250 = vmatpush1.bf16.msra.mxu0 0
      %251 = vmatprep.mubr.bf16.mxu0 0
      %252 = vmatmul.mubr.bf16.gmra.mrb[0].mxu0 %v217
      %v253 = vpop.f32.mrb[0].mxu0
      %v254 = vadd.f32 %v183, %v253
      %v255 = vpop.f32.mrb[0].mxu0
      %v256 = vadd.f32 %v183, %v255
      %v257 = vpop.f32.mrb[0].mxu0
      %v258 = vpop.f32.mrb[0].mxu0
      %259 = vdwg.mxu0
      %vm260 = vcmp.ge.f32.partialorder %v254, 0.0
      %vm261 = vcmp.ge.f32.partialorder %v256, 0.0
      %v262 = vmul.f32 %v254, 0.2
      %v263 = vmul.f32 %v256, 0.2
      %v264 = vsel %vm260, %v254, %v262
      %v265 = vsel %vm261, %v256, %v263
      %266 = vst [vmem:[%s170] sm:$0xff] %v264
      %267 = vst [vmem:[%s170 + $0x8] sm:$0xff] %v265
      %p268 = scmp.lt.s32.totalorder %s14, 1
      %s269 = scalar_select %p268, %s14, 1
      %s270 = smul.addr %s269, 2
      %s271 = smul.addr %s270, 8
      %s272 = scalar_lea.vmem %s3, %s271
      // Predicated region
      $region33: #{discriminator_forward.5} parent=31 // pred_check
        %p273 = pneg %p100
      $region34: #{discriminator_forward.5} parent=31 // pred_check_branch
        %275 = sbr.rel (%p273) target = $region36
      $region35: #{discriminator_forward.5} parent=31 // pred_region
        _
      $region36: #{discriminator_forward.5} parent=31 // pred_fallthru
        _
    $region32: #{discriminator_forward.5} parent=5 // pred_fallthru
      _
    %p276 = scmp.le.s32.totalorder 2, %s9
    // Predicated region
    $region37: #{discriminator_forward.5} parent=5 // pred_check
      %p277 = pneg %p276
    $region38: #{discriminator_forward.5} parent=5 // pred_check_branch
      %279 = sbr.rel (%p277) target = $region40
    $region39: #{discriminator_forward.5} parent=5 // pred_region
      %s280 = ssub.s32 %s9, 2
      // Predicated region
      $region41: #{discriminator_forward.5} parent=39 // pred_check
        %p281 = pneg %p106
      $region42: #{discriminator_forward.5} parent=39 // pred_check_branch
        %283 = sbr.rel (%p281) target = $region44
      $region43: #{discriminator_forward.5} parent=39 // pred_region
        %p284 = scmp.lt.s32.totalorder %s15, 1
        %s285 = scalar_select %p284, %s15, 1
        %s286 = smul.addr %s285, 2
        %s287 = smul.addr %s286, 8
        %s288 = scalar_lea.vmem %s3, %s287
      $region44: #{discriminator_forward.5} parent=39 // pred_fallthru
        _
    $region40: #{discriminator_forward.5} parent=5 // pred_fallthru
      _
  $region6: #{discriminator_forward.5} parent=0 // loop_footer
    %s13 = sadd.s32 1, %s9
  $region7: #{discriminator_forward.5} parent=0 // loop_footer_branch
    %8 = sbr.rel target = $region3
  $region8: #{discriminator_forward.5} parent=0 // loop_exit
    _

// kernel: discriminator_forward.6
$region0: #{discriminator_forward.6}
  #allocation0 [shape = 'u32[]', space=smem, size = 0x4, offset = 0x4, fixed_abs, tag = 'smem constant byte address 0x4 - core index']
  #allocation1 [shape = 'u32[144,128]{1,0:T(1,128)}', space=vmem, size = 0x12000, scoped, tag = 'internal scratch']
  %s0 = inlined_call_operand.vmem [shape: bf16[16,128], index: 0, kind: input, shape index: {}]
  %s1 = inlined_call_operand.vmem [shape: bf16[2,128,64], index: 1, kind: input, shape index: {}]
  %s2 = inlined_call_operand.vmem [shape: f32[16,1], index: 2, kind: input, shape index: {}]
  %s3 = inlined_call_operand.vmem [shape: f32[2,16,64], index: 3, kind: output, shape index: {}]
  %s4 = sld [smem:[#allocation0]]
  $region45: #{discriminator_forward.6} parent=0
    _
  %s6 = ssub.s32 1, %s4
  %s7 = scalar_select 0, %s6, %s4
  loop: start=0, step=1, limit=4
  $region2: #{discriminator_forward.6} parent=0 // loop_pre_header
    _
  $region3: #{discriminator_forward.6} parent=0 // loop_header
    %s9 = sphi 0, %s13
    %p10 = scmp.ge.s32.totalorder %s9, 4
    %s17 = sphi 0, %s17
    %s19 = sphi 0, %s17
    %s20 = sphi 0, %s19
    %s34 = sphi 0, %s20
    %s40 = sphi 0, %s42
    %s43 = sphi 0, %s40
    %s44 = sphi 0, %s43
    %s60 = sphi 0, %s44
    %s64 = sphi 0, %s64
    %s66 = sphi 0, %s64
    %s67 = sphi 0, %s66
    %s81 = sphi 0, %s67
    %s87 = sphi 0, %s89
    %s90 = sphi 0, %s87
    %s91 = sphi 0, %s90
    %s107 = sphi 0, %s91
  $region4: #{discriminator_forward.6} parent=0 // loop_header_branch
    %12 = sbr.rel (%p10) target = $region8
  $region5: #{discriminator_forward.6} parent=0 // loop_body
    %s14 = ssub.s32 %s9, 1
    %s15 = ssub.s32 %s9, 2
    %s16 = sadd.s32 %s9, 1
    %s18 = sadd.s32 %s17, 1
    %p21 = scmp.eq.s32.totalorder %s9, 1
    %p22 = scmp.ne.s32.totalorder %s17, %s19
    %p23 = scmp.eq.s32.totalorder %s9, 0
    %p24 = por %p22, %p23
    %p25 = scmp.ne.s32.totalorder %s17, %s19
    %p26 = scmp.eq.s32.totalorder %s14, 1
    %p27 = por %p25, %p26
    %p28 = scmp.ne.s32.totalorder %s19, %s20
    %p29 = scmp.eq.s32.totalorder %s14, 0
    %p30 = por %p28, %p29
    %p31 = scmp.ne.s32.totalorder %s19, %s20
    %p32 = scmp.eq.s32.totalorder %s15, 1
    %p33 = por %p31, %p32
    %p35 = scmp.ne.s32.totalorder %s20, %s34
    %p36 = scmp.eq.s32.totalorder %s15, 0
    %p37 = por %p35, %p36
    %s38 = ssub.s32 %s9, %s16
    %p39 = scmp.eq.s32.totalorder %s38, 0
    %s41 = sadd.s32 %s40, 1
    %s42 = scalar_select %p39, %s40, %s41
    %p45 = pneg %p39
    %p46 = scmp.eq.s32.totalorder %s9, 1
    %p47 = por %p45, %p46
    %p48 = scmp.ne.s32.totalorder %s40, %s43
    %p49 = scmp.eq.s32.totalorder %s9, 0
    %p50 = por %p48, %p49
    %p51 = scmp.ne.s32.totalorder %s40, %s43
    %p52 = scmp.eq.s32.totalorder %s14, 1
    %p53 = por %p51, %p52
    %p54 = scmp.ne.s32.totalorder %s43, %s44
    %p55 = scmp.eq.s32.totalorder %s14, 0
    %p56 = por %p54, %p55
    %p57 = scmp.ne.s32.totalorder %s43, %s44
    %p58 = scmp.eq.s32.totalorder %s15, 1
    %p59 = por %p57, %p58
    %p61 = scmp.ne.s32.totalorder %s44, %s60
    %p62 = scmp.eq.s32.totalorder %s15, 0
    %p63 = por %p61, %p62
    %s65 = sadd.s32 %s64, 1
    %p68 = scmp.eq.s32.totalorder %s9, 1
    %p69 = scmp.ne.s32.totalorder %s64, %s66
    %p70 = scmp.eq.s32.totalorder %s9, 0
    %p71 = por %p69, %p70
    %p72 = scmp.ne.s32.totalorder %s64, %s66
    %p73 = scmp.eq.s32.totalorder %s14, 1
    %p74 = por %p72, %p73
    %p75 = scmp.ne.s32.totalorder %s66, %s67
    %p76 = scmp.eq.s32.totalorder %s14, 0
    %p77 = por %p75, %p76
    %p78 = scmp.ne.s32.totalorder %s66, %s67
    %p79 = scmp.eq.s32.totalorder %s15, 1
    %p80 = por %p78, %p79
    %p82 = scmp.ne.s32.totalorder %s67, %s81
    %p83 = scmp.eq.s32.totalorder %s15, 0
    %p84 = por %p82, %p83
    %s85 = ssub.s32 %s9, %s16
    %p86 = scmp.eq.s32.totalorder %s85, 0
    %s88 = sadd.s32 %s87, 1
    %s89 = scalar_select %p86, %s87, %s88
    %p92 = pneg %p86
    %p93 = scmp.eq.s32.totalorder %s9, 1
    %p94 = por %p92, %p93
    %p95 = scmp.ne.s32.totalorder %s87, %s90
    %p96 = scmp.eq.s32.totalorder %s9, 0
    %p97 = por %p95, %p96
    %p98 = scmp.ne.s32.totalorder %s87, %s90
    %p99 = scmp.eq.s32.totalorder %s14, 1
    %p100 = por %p98, %p99
    %p101 = scmp.ne.s32.totalorder %s90, %s91
    %p102 = scmp.eq.s32.totalorder %s14, 0
    %p103 = por %p101, %p102
    %p104 = scmp.ne.s32.totalorder %s90, %s91
    %p105 = scmp.eq.s32.totalorder %s15, 1
    %p106 = por %p104, %p105
    %p108 = scmp.ne.s32.totalorder %s91, %s107
    %p109 = scmp.eq.s32.totalorder %s15, 0
    %p110 = por %p108, %p109
    %p111 = scmp.le.s32.totalorder 1, %s9
    %p112 = scmp.lt.s32.totalorder %s9, 3
    %p113 = pnand %p111, %p112
    %p114 = pneg %p113
    // Predicated region
    $region9: #{discriminator_forward.6} parent=5 // pred_check
      _
    $region10: #{discriminator_forward.6} parent=5 // pred_check_branch
      %116 = sbr.rel (%p113) target = $region12
    $region11: #{discriminator_forward.6} parent=5 // pred_region
      %s117 = ssub.s32 %s9, 1
      // Predicated region
      $region13: #{discriminator_forward.6} parent=11 // pred_check
        %p118 = pneg %p30
      $region14: #{discriminator_forward.6} parent=11 // pred_check_branch
        %120 = sbr.rel (%p118) target = $region16
      $region15: #{discriminator_forward.6} parent=11 // pred_region
        _
      $region16: #{discriminator_forward.6} parent=11 // pred_fallthru
        _
      // Predicated region
      $region17: #{discriminator_forward.6} parent=11 // pred_check
        %p121 = pneg %p77
      $region18: #{discriminator_forward.6} parent=11 // pred_check_branch
        %123 = sbr.rel (%p121) target = $region20
      $region19: #{discriminator_forward.6} parent=11 // pred_region
        _
      $region20: #{discriminator_forward.6} parent=11 // pred_fallthru
        _
    $region12: #{discriminator_forward.6} parent=5 // pred_fallthru
      _
    %p124 = scmp.lt.s32.totalorder %s9, 2
    // Predicated region
    $region21: #{discriminator_forward.6} parent=5 // pred_check
      %p125 = pneg %p124
    $region22: #{discriminator_forward.6} parent=5 // pred_check_branch
      %127 = sbr.rel (%p125) target = $region24
    $region23: #{discriminator_forward.6} parent=5 // pred_region
      // Predicated region
      $region25: #{discriminator_forward.6} parent=23 // pred_check
        %p128 = pneg %p50
      $region26: #{discriminator_forward.6} parent=23 // pred_check_branch
        %130 = sbr.rel (%p128) target = $region28
      $region27: #{discriminator_forward.6} parent=23 // pred_region
        %p131 = scmp.lt.s32.totalorder %s9, 1
        %s132 = scalar_select %p131, %s9, 1
        %s133 = smul.addr %s132, 16
        %s134 = smul.addr %s133, 4
        %s135 = scalar_lea.vmem %s1, %s134
      $region28: #{discriminator_forward.6} parent=23 // pred_fallthru
        _
    $region24: #{discriminator_forward.6} parent=5 // pred_fallthru
      _
    %p136 = scmp.le.s32.totalorder 1, %s9
    %p137 = scmp.lt.s32.totalorder %s9, 3
    %p138 = pnand %p136, %p137
    %p139 = pneg %p138
    // Predicated region
    $region29: #{discriminator_forward.6} parent=5 // pred_check
      _
    $region30: #{discriminator_forward.6} parent=5 // pred_check_branch
      %141 = sbr.rel (%p138) target = $region32
    $region31: #{discriminator_forward.6} parent=5 // pred_region
      %s142 = ssub.s32 %s9, 1
      %p143 = pneg %p30
      %p144 = pneg %p27
      %p145 = scmp.lt.s32.totalorder %s14, 1
      %s146 = scalar_select %p145, %s14, 1
      %s147 = smul.addr %s146, 16
      %s148 = smul.addr %s147, 4
      %s149 = scalar_lea.vmem %s1, %s148
      %p150 = pneg %p56
      %p151 = pneg %p53
      %p152 = pneg %p77
      %p153 = pneg %p74
      %p154 = pneg %p103
      %p155 = pneg %p100
      %p156 = scmp.lt.s32.totalorder %s14, 1
      %s157 = scalar_select %p156, %s14, 1
      %s158 = smul.addr %s157, 2
      %s159 = smul.addr %s158, 8
      %s160 = scalar_lea.vmem %s3, %s159
      %p161 = scmp.lt.s32.totalorder %s14, 1
      %s162 = scalar_select %p161, %s14, 1
      %s163 = smul.addr %s162, 16
      %s164 = smul.addr %s163, 4
      %s165 = scalar_lea.vmem %s1, %s164
      %p166 = scmp.lt.s32.totalorder %s14, 1
      %s167 = scalar_select %p166, %s14, 1
      %s168 = smul.addr %s167, 2
      %s169 = smul.addr %s168, 8
      %s170 = scalar_lea.vmem %s3, %s169
      %v172 = vld [vmem:[%s0] sm:$0xf]
      %v173 = vld [vmem:[%s0 + $0x4] sm:$0xf]
      %v174 = vld [vmem:[%s165] sm:$0xf]
      %v175 = vld [vmem:[%s165 + $0x4] sm:$0xf]
      %v176 = vld [vmem:[%s165 + $0x8] sm:$0xf]
      %v177 = vld [vmem:[%s165 + $0xc] sm:$0xf]
      %v178 = vld [vmem:[%s165 + $0x10] sm:$0xf]
      %v179 = vld [vmem:[%s165 + $0x14] sm:$0xf]
      %v180 = vld [vmem:[%s165 + $0x18] sm:$0xf]
      %v181 = vld [vmem:[%s165 + $0x1c] sm:$0xf]
      %v182 = vld [vmem:[%s165 + $0x20] sm:$0xf]
      %v183 = vld [vmem:[%s165 + $0x24] sm:$0xf]
      %v184 = vld [vmem:[%s165 + $0x28] sm:$0xf]
      %v185 = vld [vmem:[%s165 + $0x2c] sm:$0xf]
      %v186 = vld [vmem:[%s165 + $0x30] sm:$0xf]
      %v187 = vld [vmem:[%s165 + $0x34] sm:$0xf]
      %v188 = vld [vmem:[%s165 + $0x38] sm:$0xf]
      %v189 = vld [vmem:[%s165 + $0x3c] sm:$0xf]
      %v190 = vld [vmem:[%s2] sm:$0xff]
      %v191 = vld [vmem:[%s2 + $0x8] sm:$0xff]
      %193 = vset.pattern.permute.xlu0 0
      %194 = vperm.xlu0 %193, %v190
      %v195 = vpop.permute.xlu0 %194
      %198 = vset.pattern.permute.xlu0 0
      %199 = vperm.xlu0 %198, %v191
      %v200 = vpop.permute.xlu0 %199
      %v204 = vunpack.c.l.b16 %v172
      %v205 = vunpack.c.l.b16 %v173
      %v206 = vpack.c.b16 %v205, %v204
      %v224 = vunpack.c.l.b16 %v174
      %v225 = vunpack.c.l.b16 %v175
      %v226 = vunpack.c.l.b16 %v176
      %v227 = vunpack.c.l.b16 %v177
      %v228 = vunpack.c.l.b16 %v178
      %v229 = vunpack.c.l.b16 %v179
      %v230 = vunpack.c.l.b16 %v180
      %v231 = vunpack.c.l.b16 %v181
      %v232 = vunpack.c.l.b16 %v182
      %v233 = vunpack.c.l.b16 %v183
      %v234 = vunpack.c.l.b16 %v184
      %v235 = vunpack.c.l.b16 %v185
      %v236 = vunpack.c.l.b16 %v186
      %v237 = vunpack.c.l.b16 %v187
      %v238 = vunpack.c.l.b16 %v188
      %v239 = vunpack.c.l.b16 %v189
      %v240 = vpack.c.b16 %v225, %v224
      %v241 = vpack.c.b16 %v227, %v226
      %v242 = vpack.c.b16 %v229, %v228
      %v243 = vpack.c.b16 %v231, %v230
      %v244 = vpack.c.b16 %v233, %v232
      %v245 = vpack.c.b16 %v235, %v234
      %v246 = vpack.c.b16 %v237, %v236
      %v247 = vpack.c.b16 %v239, %v238
      %256 = vmatprep.subr.bf16.mxu0 0
      %257 = vmatpush1.bf16.msra.mxu0 %v240
      %258 = vmatprep.subr.bf16.mxu0 0
      %259 = vmatpush1.bf16.msra.mxu0 %v241
      %260 = vmatprep.subr.bf16.mxu0 0
      %261 = vmatpush1.bf16.msra.mxu0 %v242
      %262 = vmatprep.subr.bf16.mxu0 0
      %263 = vmatpush1.bf16.msra.mxu0 %v243
      %264 = vmatprep.subr.bf16.mxu0 0
      %265 = vmatpush1.bf16.msra.mxu0 %v244
      %266 = vmatprep.subr.bf16.mxu0 0
      %267 = vmatpush1.bf16.msra.mxu0 %v245
      %268 = vmatprep.subr.bf16.mxu0 0
      %269 = vmatpush1.bf16.msra.mxu0 %v246
      %270 = vmatprep.subr.bf16.mxu0 0
      %271 = vmatpush1.bf16.msra.mxu0 %v247
      %272 = vmatprep.subr.bf16.mxu0 0
      %273 = vmatpush1.bf16.msra.mxu0 0
      %274 = vmatprep.subr.bf16.mxu0 0
      %275 = vmatpush1.bf16.msra.mxu0 0
      %276 = vmatprep.subr.bf16.mxu0 0
      %277 = vmatpush1.bf16.msra.mxu0 0
      %278 = vmatprep.subr.bf16.mxu0 0
      %279 = vmatpush1.bf16.msra.mxu0 0
      %280 = vmatprep.subr.bf16.mxu0 0
      %281 = vmatpush1.bf16.msra.mxu0 0
      %282 = vmatprep.subr.bf16.mxu0 0
      %283 = vmatpush1.bf16.msra.mxu0 0
      %284 = vmatprep.subr.bf16.mxu0 0
      %285 = vmatpush1.bf16.msra.mxu0 0
      %286 = vmatprep.subr.bf16.mxu0 0
      %287 = vmatpush1.bf16.msra.mxu0 0
      %288 = vmatprep.mubr.bf16.mxu0 0
      %289 = vmatmul.mubr.bf16.gmra.mrb[0].mxu0 %v206
      %v290 = vpop.f32.mrb[0].mxu0
      %v291 = vadd.f32 %v195, %v290
      %v292 = vpop.f32.mrb[0].mxu0
      %v293 = vpop.f32.mrb[0].mxu0
      %v294 = vadd.f32 %v200, %v293
      %v295 = vpop.f32.mrb[0].mxu0
      %296 = vdwg.mxu0
      %vm297 = vcmask 523264
      %v298 = vsel %vm297, %v291, 0.0
      %299 = vadd.xlane.f32.xlu0 %v298
      %v300 = vpop.xlane.xlu0 %299
      %v301 = vsel %vm297, %v294, 0.0
      %302 = vadd.xlane.f32.xlu0 %v301
      %v303 = vpop.xlane.xlu0 %302
      %v304 = vrcp.pop 64.0
      %v305 = vmul.f32 %v300, %v304
      %v306 = vmul.f32 %v303, %v304
      %v307 = vsub.f32 %v291, %v305
      %v308 = vsub.f32 %v294, %v306
      %v309 = vmul.f32 %v307, %v307
      %v310 = vmul.f32 %v308, %v308
      %v311 = vsel %vm297, %v309, 0.0
      %312 = vadd.xlane.f32.xlu0 %v311
      %v313 = vpop.xlane.xlu0 %312
      %v314 = vsel %vm297, %v310, 0.0
      %315 = vadd.xlane.f32.xlu0 %v314
      %v316 = vpop.xlane.xlu0 %315
      %v317 = vmul.f32 %v313, %v304
      %v318 = vmul.f32 %v316, %v304
      %v319 = vadd.f32 %v317, 1e-05
      %v320 = vadd.f32 %v318, 1e-05
      %v321 = vrsqrt.pop %v319
      %v322 = vrsqrt.pop %v320
      %v323 = vmul.f32 %v307, %v321
      %v324 = vmul.f32 %v308, %v322
      %vm325 = vcmp.ge.f32.partialorder %v323, 0.0
      %vm326 = vcmp.ge.f32.partialorder %v324, 0.0
      %v327 = vmul.f32 %v323, 0.2
      %v328 = vmul.f32 %v324, 0.2
      %v329 = vsel %vm325, %v323, %v327
      %v330 = vsel %vm326, %v324, %v328
      %331 = vst.msk [vmem:[%s170] sm:$0xff] %vm297, %v329
      %332 = vst.msk [vmem:[%s170 + $0x8] sm:$0xff] %vm297, %v330
      %p333 = scmp.lt.s32.totalorder %s14, 1
      %s334 = scalar_select %p333, %s14, 1
      %s335 = smul.addr %s334, 2
      %s336 = smul.addr %s335, 8
      %s337 = scalar_lea.vmem %s3, %s336
      // Predicated region
      $region33: #{discriminator_forward.6} parent=31 // pred_check
        %p338 = pneg %p100
      $region34: #{discriminator_forward.6} parent=31 // pred_check_branch
        %340 = sbr.rel (%p338) target = $region36
      $region35: #{discriminator_forward.6} parent=31 // pred_region
        _
      $region36: #{discriminator_forward.6} parent=31 // pred_fallthru
        _
    $region32: #{discriminator_forward.6} parent=5 // pred_fallthru
      _
    %p341 = scmp.le.s32.totalorder 2, %s9
    // Predicated region
    $region37: #{discriminator_forward.6} parent=5 // pred_check
      %p342 = pneg %p341
    $region38: #{discriminator_forward.6} parent=5 // pred_check_branch
      %344 = sbr.rel (%p342) target = $region40
    $region39: #{discriminator_forward.6} parent=5 // pred_region
      %s345 = ssub.s32 %s9, 2
      // Predicated region
      $region41: #{discriminator_forward.6} parent=39 // pred_check
        %p346 = pneg %p106
      $region42: #{discriminator_forward.6} parent=39 // pred_check_branch
        %348 = sbr.rel (%p346) target = $region44
      $region43: #{discriminator_forward.6} parent=39 // pred_region
        %p349 = scmp.lt.s32.totalorder %s15, 1
        %s350 = scalar_select %p349, %s15, 1
        %s351 = smul.addr %s350, 2
        %s352 = smul.addr %s351, 8
        %s353 = scalar_lea.vmem %s3, %s352
      $region44: #{discriminator_forward.6} parent=39 // pred_fallthru
        _
    $region40: #{discriminator_forward.6} parent=5 // pred_fallthru
      _
  $region6: #{discriminator_forward.6} parent=0 // loop_footer
    %s13 = sadd.s32 1, %s9
  $region7: #{discriminator_forward.6} parent=0 // loop_footer_branch
    %8 = sbr.rel target = $region3
  $region8: #{discriminator_forward.6} parent=0 // loop_exit
    _

// kernel: discriminator_forward.7
$region0: #{discriminator_forward.7}
  #allocation0 [shape = 'u32[]', space=smem, size = 0x4, offset = 0x4, fixed_abs, tag = 'smem constant byte address 0x4 - core index']
  #allocation1 [shape = 'u32[144,128]{1,0:T(1,128)}', space=vmem, size = 0x12000, scoped, tag = 'internal scratch']
  %s0 = inlined_call_operand.vmem [shape: bf16[2,16,256], index: 0, kind: input, shape index: {}]
  %s1 = inlined_call_operand.vmem [shape: bf16[256,32], index: 1, kind: input, shape index: {}]
  %s2 = inlined_call_operand.vmem [shape: f32[1,32], index: 2, kind: input, shape index: {}]
  %s3 = inlined_call_operand.vmem [shape: f32[2,16,32], index: 3, kind: output, shape index: {}]
  %s4 = sld [smem:[#allocation0]]
  $region45: #{discriminator_forward.7} parent=0
    _
  %s6 = ssub.s32 1, %s4
  %s7 = scalar_select 0, %s6, %s4
  loop: start=0, step=1, limit=4
  $region2: #{discriminator_forward.7} parent=0 // loop_pre_header
    _
  $region3: #{discriminator_forward.7} parent=0 // loop_header
    %s9 = sphi 0, %s13
    %p10 = scmp.ge.s32.totalorder %s9, 4
    %s19 = sphi 0, %s21
    %s22 = sphi 0, %s19
    %s23 = sphi 0, %s22
    %s39 = sphi 0, %s23
    %s43 = sphi 0, %s43
    %s45 = sphi 0, %s43
    %s46 = sphi 0, %s45
    %s60 = sphi 0, %s46
    %s64 = sphi 0, %s64
    %s66 = sphi 0, %s64
    %s67 = sphi 0, %s66
    %s81 = sphi 0, %s67
    %s87 = sphi 0, %s89
    %s90 = sphi 0, %s87
    %s91 = sphi 0, %s90
    %s107 = sphi 0, %s91
  $region4: #{discriminator_forward.7} parent=0 // loop_header_branch
    %12 = sbr.rel (%p10) target = $region8
  $region5: #{discriminator_forward.7} parent=0 // loop_body
    %s14 = ssub.s32 %s9, 1
    %s15 = ssub.s32 %s9, 2
    %s16 = sadd.s32 %s9, 1
    %s17 = ssub.s32 %s9, %s16
    %p18 = scmp.eq.s32.totalorder %s17, 0
    %s20 = sadd.s32 %s19, 1
    %s21 = scalar_select %p18, %s19, %s20
    %p24 = pneg %p18
    %p25 = scmp.eq.s32.totalorder %s9, 1
    %p26 = por %p24, %p25
    %p27 = scmp.ne.s32.totalorder %s19, %s22
    %p28 = scmp.eq.s32.totalorder %s9, 0
    %p29 = por %p27, %p28
    %p30 = scmp.ne.s32.totalorder %s19, %s22
    %p31 = scmp.eq.s32.totalorder %s14, 1
    %p32 = por %p30, %p31
    %p33 = scmp.ne.s32.totalorder %s22, %s23
    %p34 = scmp.eq.s32.totalorder %s14, 0
    %p35 = por %p33, %p34
    %p36 = scmp.ne.s32.totalorder %s22, %s23
    %p37 = scmp.eq.s32.totalorder %s15, 1
    %p38 = por %p36, %p37
    %p40 = scmp.ne.s32.totalorder %s23, %s39
    %p41 = scmp.eq.s32.totalorder %s15, 0
    %p42 = por %p40, %p41
    %s44 = sadd.s32 %s43, 1
    %p47 = scmp.eq.s32.totalorder %s9, 1
    %p48 = scmp.ne.s32.totalorder %s43, %s45
    %p49 = scmp.eq.s32.totalorder %s9, 0
    %p50 = por %p48, %p49
    %p51 = scmp.ne.s32.totalorder %s43, %s45
    %p52 = scmp.eq.s32.totalorder %s14, 1
    %p53 = por %p51, %p52
    %p54 = scmp.ne.s32.totalorder %s45, %s46
    %p55 = scmp.eq.s32.totalorder %s14, 0
    %p56 = por %p54, %p55
    %p57 = scmp.ne.s32.totalorder %s45, %s46
    %p58 = scmp.eq.s32.totalorder %s15, 1
    %p59 = por %p57, %p58
    %p61 = scmp.ne.s32.totalorder %s46, %s60
    %p62 = scmp.eq.s32.totalorder %s15, 0
    %p63 = por %p61, %p62
    %s65 = sadd.s32 %s64, 1
    %p68 = scmp.eq.s32.totalorder %s9, 1
    %p69 = scmp.ne.s32.totalorder %s64, %s66
    %p70 = scmp.eq.s32.totalorder %s9, 0
    %p71 = por %p69, %p70
    %p72 = scmp.ne.s32.totalorder %s64, %s66
    %p73 = scmp.eq.s32.totalorder %s14, 1
    %p74 = por %p72, %p73
    %p75 = scmp.ne.s32.totalorder %s66, %s67
    %p76 = scmp.eq.s32.totalorder %s14, 0
    %p77 = por %p75, %p76
    %p78 = scmp.ne.s32.totalorder %s66, %s67
    %p79 = scmp.eq.s32.totalorder %s15, 1
    %p80 = por %p78, %p79
    %p82 = scmp.ne.s32.totalorder %s67, %s81
    %p83 = scmp.eq.s32.totalorder %s15, 0
    %p84 = por %p82, %p83
    %s85 = ssub.s32 %s9, %s16
    %p86 = scmp.eq.s32.totalorder %s85, 0
    %s88 = sadd.s32 %s87, 1
    %s89 = scalar_select %p86, %s87, %s88
    %p92 = pneg %p86
    %p93 = scmp.eq.s32.totalorder %s9, 1
    %p94 = por %p92, %p93
    %p95 = scmp.ne.s32.totalorder %s87, %s90
    %p96 = scmp.eq.s32.totalorder %s9, 0
    %p97 = por %p95, %p96
    %p98 = scmp.ne.s32.totalorder %s87, %s90
    %p99 = scmp.eq.s32.totalorder %s14, 1
    %p100 = por %p98, %p99
    %p101 = scmp.ne.s32.totalorder %s90, %s91
    %p102 = scmp.eq.s32.totalorder %s14, 0
    %p103 = por %p101, %p102
    %p104 = scmp.ne.s32.totalorder %s90, %s91
    %p105 = scmp.eq.s32.totalorder %s15, 1
    %p106 = por %p104, %p105
    %p108 = scmp.ne.s32.totalorder %s91, %s107
    %p109 = scmp.eq.s32.totalorder %s15, 0
    %p110 = por %p108, %p109
    %p111 = scmp.le.s32.totalorder 1, %s9
    %p112 = scmp.lt.s32.totalorder %s9, 3
    %p113 = pnand %p111, %p112
    %p114 = pneg %p113
    // Predicated region
    $region9: #{discriminator_forward.7} parent=5 // pred_check
      _
    $region10: #{discriminator_forward.7} parent=5 // pred_check_branch
      %116 = sbr.rel (%p113) target = $region12
    $region11: #{discriminator_forward.7} parent=5 // pred_region
      %s117 = ssub.s32 %s9, 1
      // Predicated region
      $region13: #{discriminator_forward.7} parent=11 // pred_check
        %p118 = pneg %p56
      $region14: #{discriminator_forward.7} parent=11 // pred_check_branch
        %120 = sbr.rel (%p118) target = $region16
      $region15: #{discriminator_forward.7} parent=11 // pred_region
        _
      $region16: #{discriminator_forward.7} parent=11 // pred_fallthru
        _
      // Predicated region
      $region17: #{discriminator_forward.7} parent=11 // pred_check
        %p121 = pneg %p77
      $region18: #{discriminator_forward.7} parent=11 // pred_check_branch
        %123 = sbr.rel (%p121) target = $region20
      $region19: #{discriminator_forward.7} parent=11 // pred_region
        _
      $region20: #{discriminator_forward.7} parent=11 // pred_fallthru
        _
    $region12: #{discriminator_forward.7} parent=5 // pred_fallthru
      _
    %p124 = scmp.lt.s32.totalorder %s9, 2
    // Predicated region
    $region21: #{discriminator_forward.7} parent=5 // pred_check
      %p125 = pneg %p124
    $region22: #{discriminator_forward.7} parent=5 // pred_check_branch
      %127 = sbr.rel (%p125) target = $region24
    $region23: #{discriminator_forward.7} parent=5 // pred_region
      // Predicated region
      $region25: #{discriminator_forward.7} parent=23 // pred_check
        %p128 = pneg %p29
      $region26: #{discriminator_forward.7} parent=23 // pred_check_branch
        %130 = sbr.rel (%p128) target = $region28
      $region27: #{discriminator_forward.7} parent=23 // pred_region
        %p131 = scmp.lt.s32.totalorder %s9, 1
        %s132 = scalar_select %p131, %s9, 1
        %s133 = smul.addr %s132, 4
        %s134 = smul.addr %s133, 4
        %s135 = scalar_lea.vmem %s0, %s134
      $region28: #{discriminator_forward.7} parent=23 // pred_fallthru
        _
    $region24: #{discriminator_forward.7} parent=5 // pred_fallthru
      _
    %p136 = scmp.le.s32.totalorder 1, %s9
    %p137 = scmp.lt.s32.totalorder %s9, 3
    %p138 = pnand %p136, %p137
    %p139 = pneg %p138
    // Predicated region
    $region29: #{discriminator_forward.7} parent=5 // pred_check
      _
    $region30: #{discriminator_forward.7} parent=5 // pred_check_branch
      %141 = sbr.rel (%p138) target = $region32
    $region31: #{discriminator_forward.7} parent=5 // pred_region
      %s142 = ssub.s32 %s9, 1
      %p143 = scmp.lt.s32.totalorder %s14, 1
      %s144 = scalar_select %p143, %s14, 1
      %s145 = smul.addr %s144, 4
      %s146 = smul.addr %s145, 4
      %s147 = scalar_lea.vmem %s0, %s146
      %p148 = pneg %p35
      %p149 = pneg %p32
      %p150 = pneg %p56
      %p151 = pneg %p53
      %p152 = pneg %p77
      %p153 = pneg %p74
      %p154 = pneg %p103
      %p155 = pneg %p100
      %p156 = scmp.lt.s32.totalorder %s14, 1
      %s157 = scalar_select %p156, %s14, 1
      %s158 = smul.addr %s157, 2
      %s159 = smul.addr %s158, 8
      %s160 = scalar_lea.vmem %s3, %s159
      %p161 = scmp.lt.s32.totalorder %s14, 1
      %s162 = scalar_select %p161, %s14, 1
      %s163 = smul.addr %s162, 4
      %s164 = smul.addr %s163, 4
      %s165 = scalar_lea.vmem %s0, %s164
      %p166 = scmp.lt.s32.totalorder %s14, 1
      %s167 = scalar_select %p166, %s14, 1
      %s168 = smul.addr %s167, 2
      %s169 = smul.addr %s168, 8
      %s170 = scalar_lea.vmem %s3, %s169
      %v172 = vld [vmem:[%s165] sm:$0xff]
      %v173 = vld [vmem:[%s165 + $0x8] sm:$0xff]
      %v174 = vld [vmem:[%s1] sm:$0xf]
      %v175 = vld [vmem:[%s1 + $0x4] sm:$0xf]
      %v176 = vld [vmem:[%s1 + $0x8] sm:$0xf]
      %v177 = vld [vmem:[%s1 + $0xc] sm:$0xf]
      %v178 = vld [vmem:[%s1 + $0x10] sm:$0xf]
      %v179 = vld [vmem:[%s1 + $0x14] sm:$0xf]
      %v180 = vld [vmem:[%s1 + $0x18] sm:$0xf]
      %v181 = vld [vmem:[%s1 + $0x1c] sm:$0xf]
      %v182 = vld [vmem:[%s1 + $0x20] sm:$0xf]
      %v183 = vld [vmem:[%s1 + $0x24] sm:$0xf]
      %v184 = vld [vmem:[%s1 + $0x28] sm:$0xf]
      %v185 = vld [vmem:[%s1 + $0x2c] sm:$0xf]
      %v186 = vld [vmem:[%s1 + $0x30] sm:$0xf]
      %v187 = vld [vmem:[%s1 + $0x34] sm:$0xf]
      %v188 = vld [vmem:[%s1 + $0x38] sm:$0xf]
      %v189 = vld [vmem:[%s1 + $0x3c] sm:$0xf]
      %v190 = vld [vmem:[%s1 + $0x40] sm:$0xf]
      %v191 = vld [vmem:[%s1 + $0x44] sm:$0xf]
      %v192 = vld [vmem:[%s1 + $0x48] sm:$0xf]
      %v193 = vld [vmem:[%s1 + $0x4c] sm:$0xf]
      %v194 = vld [vmem:[%s1 + $0x50] sm:$0xf]
      %v195 = vld [vmem:[%s1 + $0x54] sm:$0xf]
      %v196 = vld [vmem:[%s1 + $0x58] sm:$0xf]
      %v197 = vld [vmem:[%s1 + $0x5c] sm:$0xf]
      %v198 = vld [vmem:[%s1 + $0x60] sm:$0xf]
      %v199 = vld [vmem:[%s1 + $0x64] sm:$0xf]
      %v200 = vld [vmem:[%s1 + $0x68] sm:$0xf]
      %v201 = vld [vmem:[%s1 + $0x6c] sm:$0xf]
      %v202 = vld [vmem:[%s1 + $0x70] sm:$0xf]
      %v203 = vld [vmem:[%s1 + $0x74] sm:$0xf]
      %v204 = vld [vmem:[%s1 + $0x78] sm:$0xf]
      %v205 = vld [vmem:[%s1 + $0x7c] sm:$0xf]
      %v206 = vld [vmem:[%s2] sm:$0x1]
      %v208 = vlaneseq
      %v209 = vshrl.u32 %v208, 7
      %v210 = vsub.s32 0, %v209
      %v211 = vrot.slane %v206, %v210
      %v215 = vunpack.c.l.b16 %v172
      %v216 = vunpack.c.h.b16 %v172
      %v217 = vunpack.c.l.b16 %v173
      %v218 = vunpack.c.h.b16 %v173
      %v219 = vpack.c.b16 %v217, %v215
      %v220 = vpack.c.b16 %v218, %v216
      %v255 = vunpack.c.l.b16 %v174
      %v256 = vunpack.c.l.b16 %v175
      %v257 = vunpack.c.l.b16 %v176
      %v258 = vunpack.c.l.b16 %v177
      %v259 = vunpack.c.l.b16 %v178
      %v260 = vunpack.c.l.b16 %v179
      %v261 = vunpack.c.l.b16 %v180
      %v262 = vunpack.c.l.b16 %v181
      %v263 = vunpack.c.l.b16 %v182
      %v264 = vunpack.c.l.b16 %v183
      %v265 = vunpack.c.l.b16 %v184
      %v266 = vunpack.c.l.b16 %v185
      %v267 = vunpack.c.l.b16 %v186
      %v268 = vunpack.c.l.b16 %v187
      %v269 = vunpack.c.l.b16 %v188
      %v270 = vunpack.c.l.b16 %v189
      %v271 = vunpack.c.l.b16 %v190
      %v272 = vunpack.c.l.b16 %v191
      %v273 = vunpack.c.l.b16 %v192
      %v274 = vunpack.c.l.b16 %v193
      %v275 = vunpack.c.l.b16 %v194
      %v276 = vunpack.c.l.b16 %v195
      %v277 = vunpack.c.l.b16 %v196
      %v278 = vunpack.c.l.b16 %v197
      %v279 = vunpack.c.l.b16 %v198
      %v280 = vunpack.c.l.b16 %v199
      %v281 = vunpack.c.l.b16 %v200
      %v282 = vunpack.c.l.b16 %v201
      %v283 = vunpack.c.l.b16 %v202
      %v284 = vunpack.c.l.b16 %v203
      %v285 = vunpack.c.l.b16 %v204
      %v286 = vunpack.c.l.b16 %v205
      %v287 = vpack.c.b16 %v256, %v255
      %v288 = vpack.c.b16 %v258, %v257
      %v289 = vpack.c.b16 %v260, %v259
      %v290 = vpack.c.b16 %v262, %v261
      %v291 = vpack.c.b16 %v264, %v263
      %v292 = vpack.c.b16 %v266, %v265
      %v293 = vpack.c.b16 %v268, %v267
      %v294 = vpack.c.b16 %v270, %v269
      %v295 = vpack.c.b16 %v272, %v271
      %v296 = vpack.c.b16 %v274, %v273
      %v297 = vpack.c.b16 %v276, %v275
      %v298 = vpack.c.b16 %v278, %v277
      %v299 = vpack.c.b16 %v280, %v279
      %v300 = vpack.c.b16 %v282, %v281
      %v301 = vpack.c.b16 %v284, %v283
      %v302 = vpack.c.b16 %v286, %v285
      %319 = vmatprep.subr.bf16.mxu0 0
      %320 = vmatpush1.bf16.msra.mxu0 %v287
      %321 = vmatprep.subr.bf16.mxu0 0
      %322 = vmatpush1.bf16.msra.mxu0 %v288
      %323 = vmatprep.subr.bf16.mxu0 0
      %324 = vmatpush1.bf16.msra.mxu0 %v289
      %325 = vmatprep.subr.bf16.mxu0 0
      %326 = vmatpush1.bf16.msra.mxu0 %v290
      %327 = vmatprep.subr.bf16.mxu0 0
      %328 = vmatpush1.bf16.msra.mxu0 %v291
      %329 = vmatprep.subr.bf16.mxu0 0
      %330 = vmatpush1.bf16.msra.mxu0 %v292
      %331 = vmatprep.subr.bf16.mxu0 0
      %332 = vmatpush1.bf16.msra.mxu0 %v293
      %333 = vmatprep.subr.bf16.mxu0 0
      %334 = vmatpush1.bf16.msra.mxu0 %v294
      %335 = vmatprep.subr.bf16.mxu0 0
      %336 = vmatpush1.bf16.msra.mxu0 %v295
      %337 = vmatprep.subr.bf16.mxu0 0
      %338 = vmatpush1.bf16.msra.mxu0 %v296
      %339 = vmatprep.subr.bf16.mxu0 0
      %340 = vmatpush1.bf16.msra.mxu0 %v297
      %341 = vmatprep.subr.bf16.mxu0 0
      %342 = vmatpush1.bf16.msra.mxu0 %v298
      %343 = vmatprep.subr.bf16.mxu0 0
      %344 = vmatpush1.bf16.msra.mxu0 %v299
      %345 = vmatprep.subr.bf16.mxu0 0
      %346 = vmatpush1.bf16.msra.mxu0 %v300
      %347 = vmatprep.subr.bf16.mxu0 0
      %348 = vmatpush1.bf16.msra.mxu0 %v301
      %349 = vmatprep.subr.bf16.mxu0 0
      %350 = vmatpush1.bf16.msra.mxu0 %v302
      %351 = vmatprep.mubr.bf16.mxu0 %v220
      %352 = vmatmul.mubr.bf16.gmra.mrb[0].mxu0 %v219
      %v353 = vpop.f32.mrb[0].mxu0
      %v354 = vadd.f32 %v211, %v353
      %v355 = vpop.f32.mrb[0].mxu0
      %v356 = vpop.f32.mrb[0].mxu0
      %v357 = vadd.f32 %v211, %v356
      %v358 = vpop.f32.mrb[0].mxu0
      %359 = vdwg.mxu0
      %vm360 = vcmask 261120
      %v361 = vsel %vm360, %v354, 0.0
      %v362 = vsel %vm360, %v357, 0.0
      %v363 = vadd.f32 %v361, %v362
      %v364 = vrot.slane %v363, 4
      %v365 = vadd.f32 %v363, %v364
      %v366 = vrot.slane %v365, 2
      %v367 = vadd.f32 %v365, %v366
      %v368 = vrot.slane %v367, 1
      %v369 = vadd.f32 %v367, %v368
      %v370 = vrcp.pop 16.0
      %v371 = vmul.f32 %v369, %v370
      %v372 = vsub.f32 %v354, %v371
      %v373 = vsub.f32 %v357, %v371
      %v374 = vmul.f32 %v372, %v372
      %v375 = vmul.f32 %v373, %v373
      %v376 = vsel %vm360, %v374, 0.0
      %v377 = vsel %vm360, %v375, 0.0
      %v378 = vadd.f32 %v376, %v377
      %v379 = vrot.slane %v378, 4
      %v380 = vadd.f32 %v378, %v379
      %v381 = vrot.slane %v380, 2
      %v382 = vadd.f32 %v380, %v381
      %v383 = vrot.slane %v382, 1
      %v384 = vadd.f32 %v382, %v383
      %v385 = vmul.f32 %v384, %v370
      %v386 = vadd.f32 %v385, 1e-05
      %v387 = vrsqrt.pop %v386
      %v388 = vmul.f32 %v372, %v387
      %v389 = vmul.f32 %v373, %v387
      %vm390 = vcmp.ge.f32.partialorder %v388, 0.0
      %vm391 = vcmp.ge.f32.partialorder %v389, 0.0
      %v392 = vmul.f32 %v388, 0.2
      %v393 = vmul.f32 %v389, 0.2
      %v394 = vsel %vm390, %v388, %v392
      %v395 = vsel %vm391, %v389, %v393
      %396 = vst.msk [vmem:[%s170] sm:$0xff] %vm360, %v394
      %397 = vst.msk [vmem:[%s170 + $0x8] sm:$0xff] %vm360, %v395
      %p398 = scmp.lt.s32.totalorder %s14, 1
      %s399 = scalar_select %p398, %s14, 1
      %s400 = smul.addr %s399, 2
      %s401 = smul.addr %s400, 8
      %s402 = scalar_lea.vmem %s3, %s401
      // Predicated region
      $region33: #{discriminator_forward.7} parent=31 // pred_check
        %p403 = pneg %p100
      $region34: #{discriminator_forward.7} parent=31 // pred_check_branch
        %405 = sbr.rel (%p403) target = $region36
      $region35: #{discriminator_forward.7} parent=31 // pred_region
        _
      $region36: #{discriminator_forward.7} parent=31 // pred_fallthru
        _
    $region32: #{discriminator_forward.7} parent=5 // pred_fallthru
      _
    %p406 = scmp.le.s32.totalorder 2, %s9
    // Predicated region
    $region37: #{discriminator_forward.7} parent=5 // pred_check
      %p407 = pneg %p406
    $region38: #{discriminator_forward.7} parent=5 // pred_check_branch
      %409 = sbr.rel (%p407) target = $region40
    $region39: #{discriminator_forward.7} parent=5 // pred_region
      %s410 = ssub.s32 %s9, 2
      // Predicated region
      $region41: #{discriminator_forward.7} parent=39 // pred_check
        %p411 = pneg %p106
      $region42: #{discriminator_forward.7} parent=39 // pred_check_branch
        %413 = sbr.rel (%p411) target = $region44
      $region43: #{discriminator_forward.7} parent=39 // pred_region
        %p414 = scmp.lt.s32.totalorder %s15, 1
        %s415 = scalar_select %p414, %s15, 1
        %s416 = smul.addr %s415, 2
        %s417 = smul.addr %s416, 8
        %s418 = scalar_lea.vmem %s3, %s417
      $region44: #{discriminator_forward.7} parent=39 // pred_fallthru
        _
    $region40: #{discriminator_forward.7} parent=5 // pred_fallthru
      _
  $region6: #{discriminator_forward.7} parent=0 // loop_footer
    %s13 = sadd.s32 1, %s9
  $region7: #{discriminator_forward.7} parent=0 // loop_footer_branch
    %8 = sbr.rel target = $region3
  $region8: #{discriminator_forward.7} parent=0 // loop_exit
    _

// kernel: discriminator_forward.8
$region0: #{discriminator_forward.8}
  #allocation0 [shape = 'u32[]', space=smem, size = 0x4, offset = 0x4, fixed_abs, tag = 'smem constant byte address 0x4 - core index']
  #allocation1 [shape = 'u32[144,128]{1,0:T(1,128)}', space=vmem, size = 0x12000, scoped, tag = 'internal scratch']
  %s0 = inlined_call_operand.vmem [shape: bf16[2,9,512], index: 0, kind: input, shape index: {}]
  %s1 = inlined_call_operand.vmem [shape: bf16[512,64], index: 1, kind: input, shape index: {}]
  %s2 = inlined_call_operand.vmem [shape: f32[1,64], index: 2, kind: input, shape index: {}]
  %s3 = inlined_call_operand.vmem [shape: f32[2,9,64], index: 3, kind: output, shape index: {}]
  %s4 = sld [smem:[#allocation0]]
  $region45: #{discriminator_forward.8} parent=0
    _
  %s6 = ssub.s32 1, %s4
  %s7 = scalar_select 0, %s6, %s4
  loop: start=0, step=1, limit=4
  $region2: #{discriminator_forward.8} parent=0 // loop_pre_header
    _
  $region3: #{discriminator_forward.8} parent=0 // loop_header
    %s9 = sphi 0, %s13
    %p10 = scmp.ge.s32.totalorder %s9, 4
    %s19 = sphi 0, %s21
    %s22 = sphi 0, %s19
    %s23 = sphi 0, %s22
    %s39 = sphi 0, %s23
    %s43 = sphi 0, %s43
    %s45 = sphi 0, %s43
    %s46 = sphi 0, %s45
    %s60 = sphi 0, %s46
    %s64 = sphi 0, %s64
    %s66 = sphi 0, %s64
    %s67 = sphi 0, %s66
    %s81 = sphi 0, %s67
    %s87 = sphi 0, %s89
    %s90 = sphi 0, %s87
    %s91 = sphi 0, %s90
    %s107 = sphi 0, %s91
  $region4: #{discriminator_forward.8} parent=0 // loop_header_branch
    %12 = sbr.rel (%p10) target = $region8
  $region5: #{discriminator_forward.8} parent=0 // loop_body
    %s14 = ssub.s32 %s9, 1
    %s15 = ssub.s32 %s9, 2
    %s16 = sadd.s32 %s9, 1
    %s17 = ssub.s32 %s9, %s16
    %p18 = scmp.eq.s32.totalorder %s17, 0
    %s20 = sadd.s32 %s19, 1
    %s21 = scalar_select %p18, %s19, %s20
    %p24 = pneg %p18
    %p25 = scmp.eq.s32.totalorder %s9, 1
    %p26 = por %p24, %p25
    %p27 = scmp.ne.s32.totalorder %s19, %s22
    %p28 = scmp.eq.s32.totalorder %s9, 0
    %p29 = por %p27, %p28
    %p30 = scmp.ne.s32.totalorder %s19, %s22
    %p31 = scmp.eq.s32.totalorder %s14, 1
    %p32 = por %p30, %p31
    %p33 = scmp.ne.s32.totalorder %s22, %s23
    %p34 = scmp.eq.s32.totalorder %s14, 0
    %p35 = por %p33, %p34
    %p36 = scmp.ne.s32.totalorder %s22, %s23
    %p37 = scmp.eq.s32.totalorder %s15, 1
    %p38 = por %p36, %p37
    %p40 = scmp.ne.s32.totalorder %s23, %s39
    %p41 = scmp.eq.s32.totalorder %s15, 0
    %p42 = por %p40, %p41
    %s44 = sadd.s32 %s43, 1
    %p47 = scmp.eq.s32.totalorder %s9, 1
    %p48 = scmp.ne.s32.totalorder %s43, %s45
    %p49 = scmp.eq.s32.totalorder %s9, 0
    %p50 = por %p48, %p49
    %p51 = scmp.ne.s32.totalorder %s43, %s45
    %p52 = scmp.eq.s32.totalorder %s14, 1
    %p53 = por %p51, %p52
    %p54 = scmp.ne.s32.totalorder %s45, %s46
    %p55 = scmp.eq.s32.totalorder %s14, 0
    %p56 = por %p54, %p55
    %p57 = scmp.ne.s32.totalorder %s45, %s46
    %p58 = scmp.eq.s32.totalorder %s15, 1
    %p59 = por %p57, %p58
    %p61 = scmp.ne.s32.totalorder %s46, %s60
    %p62 = scmp.eq.s32.totalorder %s15, 0
    %p63 = por %p61, %p62
    %s65 = sadd.s32 %s64, 1
    %p68 = scmp.eq.s32.totalorder %s9, 1
    %p69 = scmp.ne.s32.totalorder %s64, %s66
    %p70 = scmp.eq.s32.totalorder %s9, 0
    %p71 = por %p69, %p70
    %p72 = scmp.ne.s32.totalorder %s64, %s66
    %p73 = scmp.eq.s32.totalorder %s14, 1
    %p74 = por %p72, %p73
    %p75 = scmp.ne.s32.totalorder %s66, %s67
    %p76 = scmp.eq.s32.totalorder %s14, 0
    %p77 = por %p75, %p76
    %p78 = scmp.ne.s32.totalorder %s66, %s67
    %p79 = scmp.eq.s32.totalorder %s15, 1
    %p80 = por %p78, %p79
    %p82 = scmp.ne.s32.totalorder %s67, %s81
    %p83 = scmp.eq.s32.totalorder %s15, 0
    %p84 = por %p82, %p83
    %s85 = ssub.s32 %s9, %s16
    %p86 = scmp.eq.s32.totalorder %s85, 0
    %s88 = sadd.s32 %s87, 1
    %s89 = scalar_select %p86, %s87, %s88
    %p92 = pneg %p86
    %p93 = scmp.eq.s32.totalorder %s9, 1
    %p94 = por %p92, %p93
    %p95 = scmp.ne.s32.totalorder %s87, %s90
    %p96 = scmp.eq.s32.totalorder %s9, 0
    %p97 = por %p95, %p96
    %p98 = scmp.ne.s32.totalorder %s87, %s90
    %p99 = scmp.eq.s32.totalorder %s14, 1
    %p100 = por %p98, %p99
    %p101 = scmp.ne.s32.totalorder %s90, %s91
    %p102 = scmp.eq.s32.totalorder %s14, 0
    %p103 = por %p101, %p102
    %p104 = scmp.ne.s32.totalorder %s90, %s91
    %p105 = scmp.eq.s32.totalorder %s15, 1
    %p106 = por %p104, %p105
    %p108 = scmp.ne.s32.totalorder %s91, %s107
    %p109 = scmp.eq.s32.totalorder %s15, 0
    %p110 = por %p108, %p109
    %p111 = scmp.le.s32.totalorder 1, %s9
    %p112 = scmp.lt.s32.totalorder %s9, 3
    %p113 = pnand %p111, %p112
    %p114 = pneg %p113
    // Predicated region
    $region9: #{discriminator_forward.8} parent=5 // pred_check
      _
    $region10: #{discriminator_forward.8} parent=5 // pred_check_branch
      %116 = sbr.rel (%p113) target = $region12
    $region11: #{discriminator_forward.8} parent=5 // pred_region
      %s117 = ssub.s32 %s9, 1
      // Predicated region
      $region13: #{discriminator_forward.8} parent=11 // pred_check
        %p118 = pneg %p56
      $region14: #{discriminator_forward.8} parent=11 // pred_check_branch
        %120 = sbr.rel (%p118) target = $region16
      $region15: #{discriminator_forward.8} parent=11 // pred_region
        _
      $region16: #{discriminator_forward.8} parent=11 // pred_fallthru
        _
      // Predicated region
      $region17: #{discriminator_forward.8} parent=11 // pred_check
        %p121 = pneg %p77
      $region18: #{discriminator_forward.8} parent=11 // pred_check_branch
        %123 = sbr.rel (%p121) target = $region20
      $region19: #{discriminator_forward.8} parent=11 // pred_region
        _
      $region20: #{discriminator_forward.8} parent=11 // pred_fallthru
        _
    $region12: #{discriminator_forward.8} parent=5 // pred_fallthru
      _
    %p124 = scmp.lt.s32.totalorder %s9, 2
    // Predicated region
    $region21: #{discriminator_forward.8} parent=5 // pred_check
      %p125 = pneg %p124
    $region22: #{discriminator_forward.8} parent=5 // pred_check_branch
      %127 = sbr.rel (%p125) target = $region24
    $region23: #{discriminator_forward.8} parent=5 // pred_region
      // Predicated region
      $region25: #{discriminator_forward.8} parent=23 // pred_check
        %p128 = pneg %p29
      $region26: #{discriminator_forward.8} parent=23 // pred_check_branch
        %130 = sbr.rel (%p128) target = $region28
      $region27: #{discriminator_forward.8} parent=23 // pred_region
        %p131 = scmp.lt.s32.totalorder %s9, 1
        %s132 = scalar_select %p131, %s9, 1
        %s133 = smul.addr %s132, 8
        %s134 = smul.addr %s133, 4
        %s135 = scalar_lea.vmem %s0, %s134
      $region28: #{discriminator_forward.8} parent=23 // pred_fallthru
        _
    $region24: #{discriminator_forward.8} parent=5 // pred_fallthru
      _
    %p136 = scmp.le.s32.totalorder 1, %s9
    %p137 = scmp.lt.s32.totalorder %s9, 3
    %p138 = pnand %p136, %p137
    %p139 = pneg %p138
    // Predicated region
    $region29: #{discriminator_forward.8} parent=5 // pred_check
      _
    $region30: #{discriminator_forward.8} parent=5 // pred_check_branch
      %141 = sbr.rel (%p138) target = $region32
    $region31: #{discriminator_forward.8} parent=5 // pred_region
      %s142 = ssub.s32 %s9, 1
      %p143 = scmp.lt.s32.totalorder %s14, 1
      %s144 = scalar_select %p143, %s14, 1
      %s145 = smul.addr %s144, 8
      %s146 = smul.addr %s145, 4
      %s147 = scalar_lea.vmem %s0, %s146
      %p148 = pneg %p35
      %p149 = pneg %p32
      %p150 = pneg %p56
      %p151 = pneg %p53
      %p152 = pneg %p77
      %p153 = pneg %p74
      %p154 = pneg %p103
      %p155 = pneg %p100
      %p156 = scmp.lt.s32.totalorder %s14, 1
      %s157 = scalar_select %p156, %s14, 1
      %s158 = smul.addr %s157, 2
      %s159 = smul.addr %s158, 8
      %s160 = scalar_lea.vmem %s3, %s159
      %p161 = scmp.lt.s32.totalorder %s14, 1
      %s162 = scalar_select %p161, %s14, 1
      %s163 = smul.addr %s162, 8
      %s164 = smul.addr %s163, 4
      %s165 = scalar_lea.vmem %s0, %s164
      %p166 = scmp.lt.s32.totalorder %s14, 1
      %s167 = scalar_select %p166, %s14, 1
      %s168 = smul.addr %s167, 2
      %s169 = smul.addr %s168, 8
      %s170 = scalar_lea.vmem %s3, %s169
      %v172 = vld [vmem:[%s165] sm:$0xff]
      %v173 = vld [vmem:[%s165 + $0x8] sm:$0xff]
      %v174 = vld [vmem:[%s165 + $0x10] sm:$0x11]
      %v175 = vld [vmem:[%s165 + $0x18] sm:$0x11]
      %v176 = vld [vmem:[%s1] sm:$0xf]
      %v177 = vld [vmem:[%s1 + $0x4] sm:$0xf]
      %v178 = vld [vmem:[%s1 + $0x8] sm:$0xf]
      %v179 = vld [vmem:[%s1 + $0xc] sm:$0xf]
      %v180 = vld [vmem:[%s1 + $0x10] sm:$0xf]
      %v181 = vld [vmem:[%s1 + $0x14] sm:$0xf]
      %v182 = vld [vmem:[%s1 + $0x18] sm:$0xf]
      %v183 = vld [vmem:[%s1 + $0x1c] sm:$0xf]
      %v184 = vld [vmem:[%s1 + $0x20] sm:$0xf]
      %v185 = vld [vmem:[%s1 + $0x24] sm:$0xf]
      %v186 = vld [vmem:[%s1 + $0x28] sm:$0xf]
      %v187 = vld [vmem:[%s1 + $0x2c] sm:$0xf]
      %v188 = vld [vmem:[%s1 + $0x30] sm:$0xf]
      %v189 = vld [vmem:[%s1 + $0x34] sm:$0xf]
      %v190 = vld [vmem:[%s1 + $0x38] sm:$0xf]
      %v191 = vld [vmem:[%s1 + $0x3c] sm:$0xf]
      %v192 = vld [vmem:[%s1 + $0x40] sm:$0xf]
      %v193 = vld [vmem:[%s1 + $0x44] sm:$0xf]
      %v194 = vld [vmem:[%s1 + $0x48] sm:$0xf]
      %v195 = vld [vmem:[%s1 + $0x4c] sm:$0xf]
      %v196 = vld [vmem:[%s1 + $0x50] sm:$0xf]
      %v197 = vld [vmem:[%s1 + $0x54] sm:$0xf]
      %v198 = vld [vmem:[%s1 + $0x58] sm:$0xf]
      %v199 = vld [vmem:[%s1 + $0x5c] sm:$0xf]
      %v200 = vld [vmem:[%s1 + $0x60] sm:$0xf]
      %v201 = vld [vmem:[%s1 + $0x64] sm:$0xf]
      %v202 = vld [vmem:[%s1 + $0x68] sm:$0xf]
      %v203 = vld [vmem:[%s1 + $0x6c] sm:$0xf]
      %v204 = vld [vmem:[%s1 + $0x70] sm:$0xf]
      %v205 = vld [vmem:[%s1 + $0x74] sm:$0xf]
      %v206 = vld [vmem:[%s1 + $0x78] sm:$0xf]
      %v207 = vld [vmem:[%s1 + $0x7c] sm:$0xf]
      %v208 = vld [vmem:[%s1 + $0x80] sm:$0xf]
      %v209 = vld [vmem:[%s1 + $0x84] sm:$0xf]
      %v210 = vld [vmem:[%s1 + $0x88] sm:$0xf]
      %v211 = vld [vmem:[%s1 + $0x8c] sm:$0xf]
      %v212 = vld [vmem:[%s1 + $0x90] sm:$0xf]
      %v213 = vld [vmem:[%s1 + $0x94] sm:$0xf]
      %v214 = vld [vmem:[%s1 + $0x98] sm:$0xf]
      %v215 = vld [vmem:[%s1 + $0x9c] sm:$0xf]
      %v216 = vld [vmem:[%s1 + $0xa0] sm:$0xf]
      %v217 = vld [vmem:[%s1 + $0xa4] sm:$0xf]
      %v218 = vld [vmem:[%s1 + $0xa8] sm:$0xf]
      %v219 = vld [vmem:[%s1 + $0xac] sm:$0xf]
      %v220 = vld [vmem:[%s1 + $0xb0] sm:$0xf]
      %v221 = vld [vmem:[%s1 + $0xb4] sm:$0xf]
      %v222 = vld [vmem:[%s1 + $0xb8] sm:$0xf]
      %v223 = vld [vmem:[%s1 + $0xbc] sm:$0xf]
      %v224 = vld [vmem:[%s1 + $0xc0] sm:$0xf]
      %v225 = vld [vmem:[%s1 + $0xc4] sm:$0xf]
      %v226 = vld [vmem:[%s1 + $0xc8] sm:$0xf]
      %v227 = vld [vmem:[%s1 + $0xcc] sm:$0xf]
      %v228 = vld [vmem:[%s1 + $0xd0] sm:$0xf]
      %v229 = vld [vmem:[%s1 + $0xd4] sm:$0xf]
      %v230 = vld [vmem:[%s1 + $0xd8] sm:$0xf]
      %v231 = vld [vmem:[%s1 + $0xdc] sm:$0xf]
      %v232 = vld [vmem:[%s1 + $0xe0] sm:$0xf]
      %v233 = vld [vmem:[%s1 + $0xe4] sm:$0xf]
      %v234 = vld [vmem:[%s1 + $0xe8] sm:$0xf]
      %v235 = vld [vmem:[%s1 + $0xec] sm:$0xf]
      %v236 = vld [vmem:[%s1 + $0xf0] sm:$0xf]
      %v237 = vld [vmem:[%s1 + $0xf4] sm:$0xf]
      %v238 = vld [vmem:[%s1 + $0xf8] sm:$0xf]
      %v239 = vld [vmem:[%s1 + $0xfc] sm:$0xf]
      %v240 = vld [vmem:[%s2] sm:$0x1]
      %v242 = vlaneseq
      %v243 = vshrl.u32 %v242, 7
      %v244 = vsub.s32 0, %v243
      %v245 = vrot.slane %v240, %v244
      %v251 = vunpack.c.l.b16 %v172
      %v252 = vunpack.c.h.b16 %v172
      %v253 = vunpack.c.l.b16 %v173
      %v254 = vunpack.c.h.b16 %v173
      %v255 = vunpack.c.l.b16 %v174
      %v256 = vunpack.c.h.b16 %v174
      %v257 = vunpack.c.l.b16 %v175
      %v258 = vunpack.c.h.b16 %v175
      %v259 = vpack.c.b16 %v255, %v251
      %v260 = vpack.c.b16 %v256, %v252
      %v261 = vpack.c.b16 %v257, %v253
      %v262 = vpack.c.b16 %v258, %v254
      %v331 = vunpack.c.l.b16 %v176
      %v332 = vunpack.c.l.b16 %v177
      %v333 = vunpack.c.l.b16 %v178
      %v334 = vunpack.c.l.b16 %v179
      %v335 = vunpack.c.l.b16 %v180
      %v336 = vunpack.c.l.b16 %v181
      %v337 = vunpack.c.l.b16 %v182
      %v338 = vunpack.c.l.b16 %v183
      %v339 = vunpack.c.l.b16 %v184
      %v340 = vunpack.c.l.b16 %v185
      %v341 = vunpack.c.l.b16 %v186
      %v342 = vunpack.c.l.b16 %v187
      %v343 = vunpack.c.l.b16 %v188
      %v344 = vunpack.c.l.b16 %v189
      %v345 = vunpack.c.l.b16 %v190
      %v346 = vunpack.c.l.b16 %v191
      %v347 = vunpack.c.l.b16 %v192
      %v348 = vunpack.c.l.b16 %v193
      %v349 = vunpack.c.l.b16 %v194
      %v350 = vunpack.c.l.b16 %v195
      %v351 = vunpack.c.l.b16 %v196
      %v352 = vunpack.c.l.b16 %v197
      %v353 = vunpack.c.l.b16 %v198
      %v354 = vunpack.c.l.b16 %v199
      %v355 = vunpack.c.l.b16 %v200
      %v356 = vunpack.c.l.b16 %v201
      %v357 = vunpack.c.l.b16 %v202
      %v358 = vunpack.c.l.b16 %v203
      %v359 = vunpack.c.l.b16 %v204
      %v360 = vunpack.c.l.b16 %v205
      %v361 = vunpack.c.l.b16 %v206
      %v362 = vunpack.c.l.b16 %v207
      %v363 = vunpack.c.l.b16 %v208
      %v364 = vunpack.c.l.b16 %v209
      %v365 = vunpack.c.l.b16 %v210
      %v366 = vunpack.c.l.b16 %v211
      %v367 = vunpack.c.l.b16 %v212
      %v368 = vunpack.c.l.b16 %v213
      %v369 = vunpack.c.l.b16 %v214
      %v370 = vunpack.c.l.b16 %v215
      %v371 = vunpack.c.l.b16 %v216
      %v372 = vunpack.c.l.b16 %v217
      %v373 = vunpack.c.l.b16 %v218
      %v374 = vunpack.c.l.b16 %v219
      %v375 = vunpack.c.l.b16 %v220
      %v376 = vunpack.c.l.b16 %v221
      %v377 = vunpack.c.l.b16 %v222
      %v378 = vunpack.c.l.b16 %v223
      %v379 = vunpack.c.l.b16 %v224
      %v380 = vunpack.c.l.b16 %v225
      %v381 = vunpack.c.l.b16 %v226
      %v382 = vunpack.c.l.b16 %v227
      %v383 = vunpack.c.l.b16 %v228
      %v384 = vunpack.c.l.b16 %v229
      %v385 = vunpack.c.l.b16 %v230
      %v386 = vunpack.c.l.b16 %v231
      %v387 = vunpack.c.l.b16 %v232
      %v388 = vunpack.c.l.b16 %v233
      %v389 = vunpack.c.l.b16 %v234
      %v390 = vunpack.c.l.b16 %v235
      %v391 = vunpack.c.l.b16 %v236
      %v392 = vunpack.c.l.b16 %v237
      %v393 = vunpack.c.l.b16 %v238
      %v394 = vunpack.c.l.b16 %v239
      %v395 = vpack.c.b16 %v332, %v331
      %v396 = vpack.c.b16 %v334, %v333
      %v397 = vpack.c.b16 %v336, %v335
      %v398 = vpack.c.b16 %v338, %v337
      %v399 = vpack.c.b16 %v340, %v339
      %v400 = vpack.c.b16 %v342, %v341
      %v401 = vpack.c.b16 %v344, %v343
      %v402 = vpack.c.b16 %v346, %v345
      %v403 = vpack.c.b16 %v348, %v347
      %v404 = vpack.c.b16 %v350, %v349
      %v405 = vpack.c.b16 %v352, %v351
      %v406 = vpack.c.b16 %v354, %v353
      %v407 = vpack.c.b16 %v356, %v355
      %v408 = vpack.c.b16 %v358, %v357
      %v409 = vpack.c.b16 %v360, %v359
      %v410 = vpack.c.b16 %v362, %v361
      %v411 = vpack.c.b16 %v364, %v363
      %v412 = vpack.c.b16 %v366, %v365
      %v413 = vpack.c.b16 %v368, %v367
      %v414 = vpack.c.b16 %v370, %v369
      %v415 = vpack.c.b16 %v372, %v371
      %v416 = vpack.c.b16 %v374, %v373
      %v417 = vpack.c.b16 %v376, %v375
      %v418 = vpack.c.b16 %v378, %v377
      %v419 = vpack.c.b16 %v380, %v379
      %v420 = vpack.c.b16 %v382, %v381
      %v421 = vpack.c.b16 %v384, %v383
      %v422 = vpack.c.b16 %v386, %v385
      %v423 = vpack.c.b16 %v388, %v387
      %v424 = vpack.c.b16 %v390, %v389
      %v425 = vpack.c.b16 %v392, %v391
      %v426 = vpack.c.b16 %v394, %v393
      %459 = vmatprep.subr.bf16.mxu0 0
      %460 = vmatpush1.bf16.msra.mxu0 %v395
      %461 = vmatprep.subr.bf16.mxu0 0
      %462 = vmatpush1.bf16.msra.mxu0 %v396
      %463 = vmatprep.subr.bf16.mxu0 0
      %464 = vmatpush1.bf16.msra.mxu0 %v397
      %465 = vmatprep.subr.bf16.mxu0 0
      %466 = vmatpush1.bf16.msra.mxu0 %v398
      %467 = vmatprep.subr.bf16.mxu0 0
      %468 = vmatpush1.bf16.msra.mxu0 %v399
      %469 = vmatprep.subr.bf16.mxu0 0
      %470 = vmatpush1.bf16.msra.mxu0 %v400
      %471 = vmatprep.subr.bf16.mxu0 0
      %472 = vmatpush1.bf16.msra.mxu0 %v401
      %473 = vmatprep.subr.bf16.mxu0 0
      %474 = vmatpush1.bf16.msra.mxu0 %v402
      %475 = vmatprep.subr.bf16.mxu0 0
      %476 = vmatpush1.bf16.msra.mxu0 %v403
      %477 = vmatprep.subr.bf16.mxu0 0
      %478 = vmatpush1.bf16.msra.mxu0 %v404
      %479 = vmatprep.subr.bf16.mxu0 0
      %480 = vmatpush1.bf16.msra.mxu0 %v405
      %481 = vmatprep.subr.bf16.mxu0 0
      %482 = vmatpush1.bf16.msra.mxu0 %v406
      %483 = vmatprep.subr.bf16.mxu0 0
      %484 = vmatpush1.bf16.msra.mxu0 %v407
      %485 = vmatprep.subr.bf16.mxu0 0
      %486 = vmatpush1.bf16.msra.mxu0 %v408
      %487 = vmatprep.subr.bf16.mxu0 0
      %488 = vmatpush1.bf16.msra.mxu0 %v409
      %489 = vmatprep.subr.bf16.mxu0 0
      %490 = vmatpush1.bf16.msra.mxu0 %v410
      %491 = vmatprep.mubr.bf16.mxu0 %v260
      %492 = vmatmul.mubr.bf16.gmra.mrb[0].mxu0 %v259
      %v493 = vpop.f32.mrb[0].mxu0
      %v494 = vadd.f32 %v245, %v493
      %v495 = vpop.f32.mrb[0].mxu0
      %v496 = vpop.f32.mrb[0].mxu0
      %v497 = vadd.f32 %v245, %v496
      %v498 = vpop.f32.mrb[0].mxu0
      %499 = vdwg.mxu0
      %500 = vmatprep.subr.bf16.mxu0 0
      %501 = vmatpush1.bf16.msra.mxu0 %v411
      %502 = vmatprep.subr.bf16.mxu0 0
      %503 = vmatpush1.bf16.msra.mxu0 %v412
      %504 = vmatprep.subr.bf16.mxu0 0
      %505 = vmatpush1.bf16.msra.mxu0 %v413
      %506 = vmatprep.subr.bf16.mxu0 0
      %507 = vmatpush1.bf16.msra.mxu0 %v414
      %508 = vmatprep.subr.bf16.mxu0 0
      %509 = vmatpush1.bf16.msra.mxu0 %v415
      %510 = vmatprep.subr.bf16.mxu0 0
      %511 = vmatpush1.bf16.msra.mxu0 %v416
      %512 = vmatprep.subr.bf16.mxu0 0
      %513 = vmatpush1.bf16.msra.mxu0 %v417
      %514 = vmatprep.subr.bf16.mxu0 0
      %515 = vmatpush1.bf16.msra.mxu0 %v418
      %516 = vmatprep.subr.bf16.mxu0 0
      %517 = vmatpush1.bf16.msra.mxu0 %v419
      %518 = vmatprep.subr.bf16.mxu0 0
      %519 = vmatpush1.bf16.msra.mxu0 %v420
      %520 = vmatprep.subr.bf16.mxu0 0
      %521 = vmatpush1.bf16.msra.mxu0 %v421
      %522 = vmatprep.subr.bf16.mxu0 0
      %523 = vmatpush1.bf16.msra.mxu0 %v422
      %524 = vmatprep.subr.bf16.mxu0 0
      %525 = vmatpush1.bf16.msra.mxu0 %v423
      %526 = vmatprep.subr.bf16.mxu0 0
      %527 = vmatpush1.bf16.msra.mxu0 %v424
      %528 = vmatprep.subr.bf16.mxu0 0
      %529 = vmatpush1.bf16.msra.mxu0 %v425
      %530 = vmatprep.subr.bf16.mxu0 0
      %531 = vmatpush1.bf16.msra.mxu0 %v426
      %532 = vmatprep.mubr.bf16.mxu0 %v262
      %533 = vmatmul.mubr.bf16.gmra.mrb[0].mxu0 %v261
      %v534 = vpop.f32.mrb[0].mxu0
      %v535 = vadd.f32 %v494, %v534
      %v536 = vpop.f32.mrb[0].mxu0
      %v537 = vpop.f32.mrb[0].mxu0
      %v538 = vadd.f32 %v497, %v537
      %v539 = vpop.f32.mrb[0].mxu0
      %540 = vdwg.mxu0
      %vm541 = vcmask 523264
      %v542 = vsel %vm541, %v535, 0.0
      %vm543 = vcmask 516096
      %v544 = vsel %vm543, %v538, 0.0
      %v545 = vadd.f32 %v542, %v544
      %v546 = vrot.slane %v545, 4
      %v547 = vadd.f32 %v545, %v546
      %v548 = vrot.slane %v547, 2
      %v549 = vadd.f32 %v547, %v548
      %v550 = vrot.slane %v549, 1
      %v551 = vadd.f32 %v549, %v550
      %v552 = vrcp.pop 9.0
      %v553 = vmul.f32 %v551, %v552
      %v554 = vsub.f32 %v535, %v553
      %v555 = vsub.f32 %v538, %v553
      %v556 = vmul.f32 %v554, %v554
      %v557 = vmul.f32 %v555, %v555
      %v558 = vsel %vm541, %v556, 0.0
      %v559 = vsel %vm543, %v557, 0.0
      %v560 = vadd.f32 %v558, %v559
      %v561 = vrot.slane %v560, 4
      %v562 = vadd.f32 %v560, %v561
      %v563 = vrot.slane %v562, 2
      %v564 = vadd.f32 %v562, %v563
      %v565 = vrot.slane %v564, 1
      %v566 = vadd.f32 %v564, %v565
      %v567 = vmul.f32 %v566, %v552
      %v568 = vadd.f32 %v567, 1e-05
      %v569 = vrsqrt.pop %v568
      %v570 = vmul.f32 %v554, %v569
      %v571 = vmul.f32 %v555, %v569
      %vm572 = vcmp.ge.f32.partialorder %v570, 0.0
      %vm573 = vcmp.ge.f32.partialorder %v571, 0.0
      %v574 = vmul.f32 %v570, 0.2
      %v575 = vmul.f32 %v571, 0.2
      %v576 = vsel %vm572, %v570, %v574
      %v577 = vsel %vm573, %v571, %v575
      %578 = vst.msk [vmem:[%s170] sm:$0xff] %vm541, %v576
      %579 = vst.msk [vmem:[%s170 + $0x8] sm:$0x1] %vm543, %v577
      %p580 = scmp.lt.s32.totalorder %s14, 1
      %s581 = scalar_select %p580, %s14, 1
      %s582 = smul.addr %s581, 2
      %s583 = smul.addr %s582, 8
      %s584 = scalar_lea.vmem %s3, %s583
      // Predicated region
      $region33: #{discriminator_forward.8} parent=31 // pred_check
        %p585 = pneg %p100
      $region34: #{discriminator_forward.8} parent=31 // pred_check_branch
        %587 = sbr.rel (%p585) target = $region36
      $region35: #{discriminator_forward.8} parent=31 // pred_region
        _
      $region36: #{discriminator_forward.8} parent=31 // pred_fallthru
        _
    $region32: #{discriminator_forward.8} parent=5 // pred_fallthru
      _
    %p588 = scmp.le.s32.totalorder 2, %s9
    // Predicated region
    $region37: #{discriminator_forward.8} parent=5 // pred_check
      %p589 = pneg %p588
    $region38: #{discriminator_forward.8} parent=5 // pred_check_branch
      %591 = sbr.rel (%p589) target = $region40
    $region39: #{discriminator_forward.8} parent=5 // pred_region
      %s592 = ssub.s32 %s9, 2
      // Predicated region
      $region41: #{discriminator_forward.8} parent=39 // pred_check
        %p593 = pneg %p106
      $region42: #{discriminator_forward.8} parent=39 // pred_check_branch
        %595 = sbr.rel (%p593) target = $region44
      $region43: #{discriminator_forward.8} parent=39 // pred_region
        %p596 = scmp.lt.s32.totalorder %s15, 1
        %s597 = scalar_select %p596, %s15, 1
        %s598 = smul.addr %s597, 2
        %s599 = smul.addr %s598, 8
        %s600 = scalar_lea.vmem %s3, %s599
      $region44: #{discriminator_forward.8} parent=39 // pred_fallthru
        _
    $region40: #{discriminator_forward.8} parent=5 // pred_fallthru
      _
  $region6: #{discriminator_forward.8} parent=0 // loop_footer
    %s13 = sadd.s32 1, %s9
  $region7: #{discriminator_forward.8} parent=0 // loop_footer_branch
    %8 = sbr.rel target = $region3
  $region8: #{discriminator_forward.8} parent=0 // loop_exit
    _

// kernel: discriminator_forward.9
$region0: #{discriminator_forward.9}
  #allocation0 [shape = 'u32[]', space=smem, size = 0x4, offset = 0x4, fixed_abs, tag = 'smem constant byte address 0x4 - core index']
  #allocation1 [shape = 'u32[144,128]{1,0:T(1,128)}', space=vmem, size = 0x12000, scoped, tag = 'internal scratch']
  #allocation2 [shape = 'f32[1,1]{1,0:T(1,128)S(1)}', space=vmem, size = 0x200, scoped, tag = 'scoped memory for discriminator_forward.9']
  %s0 = inlined_call_operand.vmem [shape: bf16[1,1024], index: 0, kind: input, shape index: {}]
  %s1 = inlined_call_operand.vmem [shape: bf16[2,1024,4], index: 1, kind: input, shape index: {}]
  %s2 = inlined_call_operand.<no memory space> [shape: f32[1,1], index: 2, kind: input, shape index: {}]
  %s3 = inlined_call_operand.vmem [shape: f32[2,1,4], index: 3, kind: output, shape index: {}]
  %s4 = sld [smem:[#allocation0]]
  $region45: #{discriminator_forward.9} parent=0
    _
  %s6 = ssub.s32 1, %s4
  %s7 = scalar_select 0, %s6, %s4
  %v8 = vstv %s2
  %9 = vst [vmem:[#allocation2] sm:$0x1] %v8
  loop: start=0, step=1, limit=4
  $region2: #{discriminator_forward.9} parent=0 // loop_pre_header
    _
  $region3: #{discriminator_forward.9} parent=0 // loop_header
    %s11 = sphi 0, %s15
    %p12 = scmp.ge.s32.totalorder %s11, 4
    %s19 = sphi 0, %s19
    %s21 = sphi 0, %s19
    %s22 = sphi 0, %s21
    %s36 = sphi 0, %s22
    %s42 = sphi 0, %s44
    %s45 = sphi 0, %s42
    %s46 = sphi 0, %s45
    %s62 = sphi 0, %s46
    %s66 = sphi 0, %s66
    %s68 = sphi 0, %s66
    %s69 = sphi 0, %s68
    %s83 = sphi 0, %s69
    %s89 = sphi 0, %s91
    %s92 = sphi 0, %s89
    %s93 = sphi 0, %s92
    %s109 = sphi 0, %s93
  $region4: #{discriminator_forward.9} parent=0 // loop_header_branch
    %14 = sbr.rel (%p12) target = $region8
  $region5: #{discriminator_forward.9} parent=0 // loop_body
    %s16 = ssub.s32 %s11, 1
    %s17 = ssub.s32 %s11, 2
    %s18 = sadd.s32 %s11, 1
    %s20 = sadd.s32 %s19, 1
    %p23 = scmp.eq.s32.totalorder %s11, 1
    %p24 = scmp.ne.s32.totalorder %s19, %s21
    %p25 = scmp.eq.s32.totalorder %s11, 0
    %p26 = por %p24, %p25
    %p27 = scmp.ne.s32.totalorder %s19, %s21
    %p28 = scmp.eq.s32.totalorder %s16, 1
    %p29 = por %p27, %p28
    %p30 = scmp.ne.s32.totalorder %s21, %s22
    %p31 = scmp.eq.s32.totalorder %s16, 0
    %p32 = por %p30, %p31
    %p33 = scmp.ne.s32.totalorder %s21, %s22
    %p34 = scmp.eq.s32.totalorder %s17, 1
    %p35 = por %p33, %p34
    %p37 = scmp.ne.s32.totalorder %s22, %s36
    %p38 = scmp.eq.s32.totalorder %s17, 0
    %p39 = por %p37, %p38
    %s40 = ssub.s32 %s11, %s18
    %p41 = scmp.eq.s32.totalorder %s40, 0
    %s43 = sadd.s32 %s42, 1
    %s44 = scalar_select %p41, %s42, %s43
    %p47 = pneg %p41
    %p48 = scmp.eq.s32.totalorder %s11, 1
    %p49 = por %p47, %p48
    %p50 = scmp.ne.s32.totalorder %s42, %s45
    %p51 = scmp.eq.s32.totalorder %s11, 0
    %p52 = por %p50, %p51
    %p53 = scmp.ne.s32.totalorder %s42, %s45
    %p54 = scmp.eq.s32.totalorder %s16, 1
    %p55 = por %p53, %p54
    %p56 = scmp.ne.s32.totalorder %s45, %s46
    %p57 = scmp.eq.s32.totalorder %s16, 0
    %p58 = por %p56, %p57
    %p59 = scmp.ne.s32.totalorder %s45, %s46
    %p60 = scmp.eq.s32.totalorder %s17, 1
    %p61 = por %p59, %p60
    %p63 = scmp.ne.s32.totalorder %s46, %s62
    %p64 = scmp.eq.s32.totalorder %s17, 0
    %p65 = por %p63, %p64
    %s67 = sadd.s32 %s66, 1
    %p70 = scmp.eq.s32.totalorder %s11, 1
    %p71 = scmp.ne.s32.totalorder %s66, %s68
    %p72 = scmp.eq.s32.totalorder %s11, 0
    %p73 = por %p71, %p72
    %p74 = scmp.ne.s32.totalorder %s66, %s68
    %p75 = scmp.eq.s32.totalorder %s16, 1
    %p76 = por %p74, %p75
    %p77 = scmp.ne.s32.totalorder %s68, %s69
    %p78 = scmp.eq.s32.totalorder %s16, 0
    %p79 = por %p77, %p78
    %p80 = scmp.ne.s32.totalorder %s68, %s69
    %p81 = scmp.eq.s32.totalorder %s17, 1
    %p82 = por %p80, %p81
    %p84 = scmp.ne.s32.totalorder %s69, %s83
    %p85 = scmp.eq.s32.totalorder %s17, 0
    %p86 = por %p84, %p85
    %s87 = ssub.s32 %s11, %s18
    %p88 = scmp.eq.s32.totalorder %s87, 0
    %s90 = sadd.s32 %s89, 1
    %s91 = scalar_select %p88, %s89, %s90
    %p94 = pneg %p88
    %p95 = scmp.eq.s32.totalorder %s11, 1
    %p96 = por %p94, %p95
    %p97 = scmp.ne.s32.totalorder %s89, %s92
    %p98 = scmp.eq.s32.totalorder %s11, 0
    %p99 = por %p97, %p98
    %p100 = scmp.ne.s32.totalorder %s89, %s92
    %p101 = scmp.eq.s32.totalorder %s16, 1
    %p102 = por %p100, %p101
    %p103 = scmp.ne.s32.totalorder %s92, %s93
    %p104 = scmp.eq.s32.totalorder %s16, 0
    %p105 = por %p103, %p104
    %p106 = scmp.ne.s32.totalorder %s92, %s93
    %p107 = scmp.eq.s32.totalorder %s17, 1
    %p108 = por %p106, %p107
    %p110 = scmp.ne.s32.totalorder %s93, %s109
    %p111 = scmp.eq.s32.totalorder %s17, 0
    %p112 = por %p110, %p111
    %p113 = scmp.le.s32.totalorder 1, %s11
    %p114 = scmp.lt.s32.totalorder %s11, 3
    %p115 = pnand %p113, %p114
    %p116 = pneg %p115
    // Predicated region
    $region9: #{discriminator_forward.9} parent=5 // pred_check
      _
    $region10: #{discriminator_forward.9} parent=5 // pred_check_branch
      %118 = sbr.rel (%p115) target = $region12
    $region11: #{discriminator_forward.9} parent=5 // pred_region
      %s119 = ssub.s32 %s11, 1
      // Predicated region
      $region13: #{discriminator_forward.9} parent=11 // pred_check
        %p120 = pneg %p32
      $region14: #{discriminator_forward.9} parent=11 // pred_check_branch
        %122 = sbr.rel (%p120) target = $region16
      $region15: #{discriminator_forward.9} parent=11 // pred_region
        _
      $region16: #{discriminator_forward.9} parent=11 // pred_fallthru
        _
      // Predicated region
      $region17: #{discriminator_forward.9} parent=11 // pred_check
        %p123 = pneg %p79
      $region18: #{discriminator_forward.9} parent=11 // pred_check_branch
        %125 = sbr.rel (%p123) target = $region20
      $region19: #{discriminator_forward.9} parent=11 // pred_region
        _
      $region20: #{discriminator_forward.9} parent=11 // pred_fallthru
        _
    $region12: #{discriminator_forward.9} parent=5 // pred_fallthru
      _
    %p126 = scmp.lt.s32.totalorder %s11, 2
    // Predicated region
    $region21: #{discriminator_forward.9} parent=5 // pred_check
      %p127 = pneg %p126
    $region22: #{discriminator_forward.9} parent=5 // pred_check_branch
      %129 = sbr.rel (%p127) target = $region24
    $region23: #{discriminator_forward.9} parent=5 // pred_region
      // Predicated region
      $region25: #{discriminator_forward.9} parent=23 // pred_check
        %p130 = pneg %p52
      $region26: #{discriminator_forward.9} parent=23 // pred_check_branch
        %132 = sbr.rel (%p130) target = $region28
      $region27: #{discriminator_forward.9} parent=23 // pred_region
        %p133 = scmp.lt.s32.totalorder %s11, 1
        %s134 = scalar_select %p133, %s11, 1
        %s135 = smul.addr %s134, 128
        %s136 = smul.addr %s135, 4
        %s137 = scalar_lea.vmem %s1, %s136
      $region28: #{discriminator_forward.9} parent=23 // pred_fallthru
        _
    $region24: #{discriminator_forward.9} parent=5 // pred_fallthru
      _
    %p138 = scmp.le.s32.totalorder 1, %s11
    %p139 = scmp.lt.s32.totalorder %s11, 3
    %p140 = pnand %p138, %p139
    %p141 = pneg %p140
    // Predicated region
    $region29: #{discriminator_forward.9} parent=5 // pred_check
      _
    $region30: #{discriminator_forward.9} parent=5 // pred_check_branch
      %143 = sbr.rel (%p140) target = $region32
    $region31: #{discriminator_forward.9} parent=5 // pred_region
      %s144 = ssub.s32 %s11, 1
      %p145 = pneg %p32
      %p146 = pneg %p29
      %p147 = scmp.lt.s32.totalorder %s16, 1
      %s148 = scalar_select %p147, %s16, 1
      %s149 = smul.addr %s148, 128
      %s150 = smul.addr %s149, 4
      %s151 = scalar_lea.vmem %s1, %s150
      %p152 = pneg %p58
      %p153 = pneg %p55
      %p154 = pneg %p79
      %p155 = pneg %p76
      %p156 = pneg %p105
      %p157 = pneg %p102
      %p158 = scmp.lt.s32.totalorder %s16, 1
      %s159 = scalar_select %p158, %s16, 1
      %s160 = scalar_lea.vmem %s3, %s159
      %p161 = scmp.lt.s32.totalorder %s16, 1
      %s162 = scalar_select %p161, %s16, 1
      %s163 = smul.addr %s162, 128
      %s164 = smul.addr %s163, 4
      %s165 = scalar_lea.vmem %s1, %s164
      %p166 = scmp.lt.s32.totalorder %s16, 1
      %s167 = scalar_select %p166, %s16, 1
      %s168 = scalar_lea.vmem %s3, %s167
      %v170 = vld [vmem:[%s0] sm:$0xff]
      %v171 = vld [vmem:[%s165] sm:$0xf]
      %v172 = vld [vmem:[%s165 + $0x4] sm:$0xf]
      %v173 = vld [vmem:[%s165 + $0x8] sm:$0xf]
      %v174 = vld [vmem:[%s165 + $0xc] sm:$0xf]
      %v175 = vld [vmem:[%s165 + $0x10] sm:$0xf]
      %v176 = vld [vmem:[%s165 + $0x14] sm:$0xf]
      %v177 = vld [vmem:[%s165 + $0x18] sm:$0xf]
      %v178 = vld [vmem:[%s165 + $0x1c] sm:$0xf]
      %v179 = vld [vmem:[%s165 + $0x20] sm:$0xf]
      %v180 = vld [vmem:[%s165 + $0x24] sm:$0xf]
      %v181 = vld [vmem:[%s165 + $0x28] sm:$0xf]
      %v182 = vld [vmem:[%s165 + $0x2c] sm:$0xf]
      %v183 = vld [vmem:[%s165 + $0x30] sm:$0xf]
      %v184 = vld [vmem:[%s165 + $0x34] sm:$0xf]
      %v185 = vld [vmem:[%s165 + $0x38] sm:$0xf]
      %v186 = vld [vmem:[%s165 + $0x3c] sm:$0xf]
      %v187 = vld [vmem:[%s165 + $0x40] sm:$0xf]
      %v188 = vld [vmem:[%s165 + $0x44] sm:$0xf]
      %v189 = vld [vmem:[%s165 + $0x48] sm:$0xf]
      %v190 = vld [vmem:[%s165 + $0x4c] sm:$0xf]
      %v191 = vld [vmem:[%s165 + $0x50] sm:$0xf]
      %v192 = vld [vmem:[%s165 + $0x54] sm:$0xf]
      %v193 = vld [vmem:[%s165 + $0x58] sm:$0xf]
      %v194 = vld [vmem:[%s165 + $0x5c] sm:$0xf]
      %v195 = vld [vmem:[%s165 + $0x60] sm:$0xf]
      %v196 = vld [vmem:[%s165 + $0x64] sm:$0xf]
      %v197 = vld [vmem:[%s165 + $0x68] sm:$0xf]
      %v198 = vld [vmem:[%s165 + $0x6c] sm:$0xf]
      %v199 = vld [vmem:[%s165 + $0x70] sm:$0xf]
      %v200 = vld [vmem:[%s165 + $0x74] sm:$0xf]
      %v201 = vld [vmem:[%s165 + $0x78] sm:$0xf]
      %v202 = vld [vmem:[%s165 + $0x7c] sm:$0xf]
      %v203 = vld [vmem:[%s165 + $0x80] sm:$0xf]
      %v204 = vld [vmem:[%s165 + $0x84] sm:$0xf]
      %v205 = vld [vmem:[%s165 + $0x88] sm:$0xf]
      %v206 = vld [vmem:[%s165 + $0x8c] sm:$0xf]
      %v207 = vld [vmem:[%s165 + $0x90] sm:$0xf]
      %v208 = vld [vmem:[%s165 + $0x94] sm:$0xf]
      %v209 = vld [vmem:[%s165 + $0x98] sm:$0xf]
      %v210 = vld [vmem:[%s165 + $0x9c] sm:$0xf]
      %v211 = vld [vmem:[%s165 + $0xa0] sm:$0xf]
      %v212 = vld [vmem:[%s165 + $0xa4] sm:$0xf]
      %v213 = vld [vmem:[%s165 + $0xa8] sm:$0xf]
      %v214 = vld [vmem:[%s165 + $0xac] sm:$0xf]
      %v215 = vld [vmem:[%s165 + $0xb0] sm:$0xf]
      %v216 = vld [vmem:[%s165 + $0xb4] sm:$0xf]
      %v217 = vld [vmem:[%s165 + $0xb8] sm:$0xf]
      %v218 = vld [vmem:[%s165 + $0xbc] sm:$0xf]
      %v219 = vld [vmem:[%s165 + $0xc0] sm:$0xf]
      %v220 = vld [vmem:[%s165 + $0xc4] sm:$0xf]
      %v221 = vld [vmem:[%s165 + $0xc8] sm:$0xf]
      %v222 = vld [vmem:[%s165 + $0xcc] sm:$0xf]
      %v223 = vld [vmem:[%s165 + $0xd0] sm:$0xf]
      %v224 = vld [vmem:[%s165 + $0xd4] sm:$0xf]
      %v225 = vld [vmem:[%s165 + $0xd8] sm:$0xf]
      %v226 = vld [vmem:[%s165 + $0xdc] sm:$0xf]
      %v227 = vld [vmem:[%s165 + $0xe0] sm:$0xf]
      %v228 = vld [vmem:[%s165 + $0xe4] sm:$0xf]
      %v229 = vld [vmem:[%s165 + $0xe8] sm:$0xf]
      %v230 = vld [vmem:[%s165 + $0xec] sm:$0xf]
      %v231 = vld [vmem:[%s165 + $0xf0] sm:$0xf]
      %v232 = vld [vmem:[%s165 + $0xf4] sm:$0xf]
      %v233 = vld [vmem:[%s165 + $0xf8] sm:$0xf]
      %v234 = vld [vmem:[%s165 + $0xfc] sm:$0xf]
      %v235 = vld [vmem:[%s165 + $0x100] sm:$0xf]
      %v236 = vld [vmem:[%s165 + $0x104] sm:$0xf]
      %v237 = vld [vmem:[%s165 + $0x108] sm:$0xf]
      %v238 = vld [vmem:[%s165 + $0x10c] sm:$0xf]
      %v239 = vld [vmem:[%s165 + $0x110] sm:$0xf]
      %v240 = vld [vmem:[%s165 + $0x114] sm:$0xf]
      %v241 = vld [vmem:[%s165 + $0x118] sm:$0xf]
      %v242 = vld [vmem:[%s165 + $0x11c] sm:$0xf]
      %v243 = vld [vmem:[%s165 + $0x120] sm:$0xf]
      %v244 = vld [vmem:[%s165 + $0x124] sm:$0xf]
      %v245 = vld [vmem:[%s165 + $0x128] sm:$0xf]
      %v246 = vld [vmem:[%s165 + $0x12c] sm:$0xf]
      %v247 = vld [vmem:[%s165 + $0x130] sm:$0xf]
      %v248 = vld [vmem:[%s165 + $0x134] sm:$0xf]
      %v249 = vld [vmem:[%s165 + $0x138] sm:$0xf]
      %v250 = vld [vmem:[%s165 + $0x13c] sm:$0xf]
      %v251 = vld [vmem:[%s165 + $0x140] sm:$0xf]
      %v252 = vld [vmem:[%s165 + $0x144] sm:$0xf]
      %v253 = vld [vmem:[%s165 + $0x148] sm:$0xf]
      %v254 = vld [vmem:[%s165 + $0x14c] sm:$0xf]
      %v255 = vld [vmem:[%s165 + $0x150] sm:$0xf]
      %v256 = vld [vmem:[%s165 + $0x154] sm:$0xf]
      %v257 = vld [vmem:[%s165 + $0x158] sm:$0xf]
      %v258 = vld [vmem:[%s165 + $0x15c] sm:$0xf]
      %v259 = vld [vmem:[%s165 + $0x160] sm:$0xf]
      %v260 = vld [vmem:[%s165 + $0x164] sm:$0xf]
      %v261 = vld [vmem:[%s165 + $0x168] sm:$0xf]
      %v262 = vld [vmem:[%s165 + $0x16c] sm:$0xf]
      %v263 = vld [vmem:[%s165 + $0x170] sm:$0xf]
      %v264 = vld [vmem:[%s165 + $0x174] sm:$0xf]
      %v265 = vld [vmem:[%s165 + $0x178] sm:$0xf]
      %v266 = vld [vmem:[%s165 + $0x17c] sm:$0xf]
      %v267 = vld [vmem:[%s165 + $0x180] sm:$0xf]
      %v268 = vld [vmem:[%s165 + $0x184] sm:$0xf]
      %v269 = vld [vmem:[%s165 + $0x188] sm:$0xf]
      %v270 = vld [vmem:[%s165 + $0x18c] sm:$0xf]
      %v271 = vld [vmem:[%s165 + $0x190] sm:$0xf]
      %v272 = vld [vmem:[%s165 + $0x194] sm:$0xf]
      %v273 = vld [vmem:[%s165 + $0x198] sm:$0xf]
      %v274 = vld [vmem:[%s165 + $0x19c] sm:$0xf]
      %v275 = vld [vmem:[%s165 + $0x1a0] sm:$0xf]
      %v276 = vld [vmem:[%s165 + $0x1a4] sm:$0xf]
      %v277 = vld [vmem:[%s165 + $0x1a8] sm:$0xf]
      %v278 = vld [vmem:[%s165 + $0x1ac] sm:$0xf]
      %v279 = vld [vmem:[%s165 + $0x1b0] sm:$0xf]
      %v280 = vld [vmem:[%s165 + $0x1b4] sm:$0xf]
      %v281 = vld [vmem:[%s165 + $0x1b8] sm:$0xf]
      %v282 = vld [vmem:[%s165 + $0x1bc] sm:$0xf]
      %v283 = vld [vmem:[%s165 + $0x1c0] sm:$0xf]
      %v284 = vld [vmem:[%s165 + $0x1c4] sm:$0xf]
      %v285 = vld [vmem:[%s165 + $0x1c8] sm:$0xf]
      %v286 = vld [vmem:[%s165 + $0x1cc] sm:$0xf]
      %v287 = vld [vmem:[%s165 + $0x1d0] sm:$0xf]
      %v288 = vld [vmem:[%s165 + $0x1d4] sm:$0xf]
      %v289 = vld [vmem:[%s165 + $0x1d8] sm:$0xf]
      %v290 = vld [vmem:[%s165 + $0x1dc] sm:$0xf]
      %v291 = vld [vmem:[%s165 + $0x1e0] sm:$0xf]
      %v292 = vld [vmem:[%s165 + $0x1e4] sm:$0xf]
      %v293 = vld [vmem:[%s165 + $0x1e8] sm:$0xf]
      %v294 = vld [vmem:[%s165 + $0x1ec] sm:$0xf]
      %v295 = vld [vmem:[%s165 + $0x1f0] sm:$0xf]
      %v296 = vld [vmem:[%s165 + $0x1f4] sm:$0xf]
      %v297 = vld [vmem:[%s165 + $0x1f8] sm:$0xf]
      %v298 = vld [vmem:[%s165 + $0x1fc] sm:$0xf]
      %v299 = vld [vmem:[#allocation2] sm:$0x1]
      %301 = vset.pattern.permute.xlu0 0
      %302 = vperm.xlu0 %301, %v299
      %v303 = vpop.permute.xlu0 %302
      %v305 = vlaneseq
      %v306 = vshrl.u32 %v305, 7
      %v307 = vsub.s32 0, %v306
      %v308 = vrot.slane %v303, %v307
      %v310 = vcombine.high %v170, %v170
      %v312 = vunpack.c.l.s4 1966171168
      %v313 = vunpack.c.0.s8 %v312
      %v314 = vlaneseq
      %v315 = vshrl.u32 %v314, 7
      %v316 = vsub.s32 %v313, %v315
      %v317 = vrot.slane %v170, %v316
      %v319 = vunpack.c.l.s4 1966171168
      %v320 = vunpack.c.0.s8 %v319
      %v321 = vlaneseq
      %v322 = vshrl.u32 %v321, 7
      %v323 = vsub.s32 %v320, %v322
      %v324 = vrot.slane %v310, %v323
      %v325 = vcombine.high %v317, %v317
      %v326 = vcombine.high %v324, %v324
      %v328 = vunpack.c.l.s4 1966171168
      %v329 = vunpack.c.0.s8 %v328
      %v330 = vlaneseq
      %v331 = vshrl.u32 %v330, 7
      %v332 = vsub.s32 %v329, %v331
      %v333 = vrot.slane %v317, %v332
      %v335 = vunpack.c.l.s4 1966171168
      %v336 = vunpack.c.0.s8 %v335
      %v337 = vlaneseq
      %v338 = vshrl.u32 %v337, 7
      %v339 = vsub.s32 %v336, %v338
      %v340 = vrot.slane %v324, %v339
      %v342 = vunpack.c.l.s4 1966171168
      %v343 = vunpack.c.0.s8 %v342
      %v344 = vlaneseq
      %v345 = vshrl.u32 %v344, 7
      %v346 = vsub.s32 %v343, %v345
      %v347 = vrot.slane %v325, %v346
      %v349 = vunpack.c.l.s4 1966171168
      %v350 = vunpack.c.0.s8 %v349
      %v351 = vlaneseq
      %v352 = vshrl.u32 %v351, 7
      %v353 = vsub.s32 %v350, %v352
      %v354 = vrot.slane %v326, %v353
      %v355 = vcombine.high %v333, %v333
      %v356 = vcombine.high %v340, %v340
      %v357 = vcombine.high %v347, %v347
      %v358 = vcombine.high %v354, %v354
      %v495 = vunpack.c.l.b16 %v171
      %v496 = vunpack.c.l.b16 %v172
      %v497 = vunpack.c.l.b16 %v173
      %v498 = vunpack.c.l.b16 %v174
      %v499 = vunpack.c.l.b16 %v175
      %v500 = vunpack.c.l.b16 %v176
      %v501 = vunpack.c.l.b16 %v177
      %v502 = vunpack.c.l.b16 %v178
      %v503 = vunpack.c.l.b16 %v179
      %v504 = vunpack.c.l.b16 %v180
      %v505 = vunpack.c.l.b16 %v181
      %v506 = vunpack.c.l.b16 %v182
      %v507 = vunpack.c.l.b16 %v183
      %v508 = vunpack.c.l.b16 %v184
      %v509 = vunpack.c.l.b16 %v185
      %v510 = vunpack.c.l.b16 %v186
      %v511 = vunpack.c.l.b16 %v187
      %v512 = vunpack.c.l.b16 %v188
      %v513 = vunpack.c.l.b16 %v189
      %v514 = vunpack.c.l.b16 %v190
      %v515 = vunpack.c.l.b16 %v191
      %v516 = vunpack.c.l.b16 %v192
      %v517 = vunpack.c.l.b16 %v193
      %v518 = vunpack.c.l.b16 %v194
      %v519 = vunpack.c.l.b16 %v195
      %v520 = vunpack.c.l.b16 %v196
      %v521 = vunpack.c.l.b16 %v197
      %v522 = vunpack.c.l.b16 %v198
      %v523 = vunpack.c.l.b16 %v199
      %v524 = vunpack.c.l.b16 %v200
      %v525 = vunpack.c.l.b16 %v201
      %v526 = vunpack.c.l.b16 %v202
      %v527 = vunpack.c.l.b16 %v203
      %v528 = vunpack.c.l.b16 %v204
      %v529 = vunpack.c.l.b16 %v205
      %v530 = vunpack.c.l.b16 %v206
      %v531 = vunpack.c.l.b16 %v207
      %v532 = vunpack.c.l.b16 %v208
      %v533 = vunpack.c.l.b16 %v209
      %v534 = vunpack.c.l.b16 %v210
      %v535 = vunpack.c.l.b16 %v211
      %v536 = vunpack.c.l.b16 %v212
      %v537 = vunpack.c.l.b16 %v213
      %v538 = vunpack.c.l.b16 %v214
      %v539 = vunpack.c.l.b16 %v215
      %v540 = vunpack.c.l.b16 %v216
      %v541 = vunpack.c.l.b16 %v217
      %v542 = vunpack.c.l.b16 %v218
      %v543 = vunpack.c.l.b16 %v219
      %v544 = vunpack.c.l.b16 %v220
      %v545 = vunpack.c.l.b16 %v221
      %v546 = vunpack.c.l.b16 %v222
      %v547 = vunpack.c.l.b16 %v223
      %v548 = vunpack.c.l.b16 %v224
      %v549 = vunpack.c.l.b16 %v225
      %v550 = vunpack.c.l.b16 %v226
      %v551 = vunpack.c.l.b16 %v227
      %v552 = vunpack.c.l.b16 %v228
      %v553 = vunpack.c.l.b16 %v229
      %v554 = vunpack.c.l.b16 %v230
      %v555 = vunpack.c.l.b16 %v231
      %v556 = vunpack.c.l.b16 %v232
      %v557 = vunpack.c.l.b16 %v233
      %v558 = vunpack.c.l.b16 %v234
      %v559 = vunpack.c.l.b16 %v235
      %v560 = vunpack.c.l.b16 %v236
      %v561 = vunpack.c.l.b16 %v237
      %v562 = vunpack.c.l.b16 %v238
      %v563 = vunpack.c.l.b16 %v239
      %v564 = vunpack.c.l.b16 %v240
      %v565 = vunpack.c.l.b16 %v241
      %v566 = vunpack.c.l.b16 %v242
      %v567 = vunpack.c.l.b16 %v243
      %v568 = vunpack.c.l.b16 %v244
      %v569 = vunpack.c.l.b16 %v245
      %v570 = vunpack.c.l.b16 %v246
      %v571 = vunpack.c.l.b16 %v247
      %v572 = vunpack.c.l.b16 %v248
      %v573 = vunpack.c.l.b16 %v249
      %v574 = vunpack.c.l.b16 %v250
      %v575 = vunpack.c.l.b16 %v251
      %v576 = vunpack.c.l.b16 %v252
      %v577 = vunpack.c.l.b16 %v253
      %v578 = vunpack.c.l.b16 %v254
      %v579 = vunpack.c.l.b16 %v255
      %v580 = vunpack.c.l.b16 %v256
      %v581 = vunpack.c.l.b16 %v257
      %v582 = vunpack.c.l.b16 %v258
      %v583 = vunpack.c.l.b16 %v259
      %v584 = vunpack.c.l.b16 %v260
      %v585 = vunpack.c.l.b16 %v261
      %v586 = vunpack.c.l.b16 %v262
      %v587 = vunpack.c.l.b16 %v263
      %v588 = vunpack.c.l.b16 %v264
      %v589 = vunpack.c.l.b16 %v265
      %v590 = vunpack.c.l.b16 %v266
      %v591 = vunpack.c.l.b16 %v267
      %v592 = vunpack.c.l.b16 %v268
      %v593 = vunpack.c.l.b16 %v269
      %v594 = vunpack.c.l.b16 %v270
      %v595 = vunpack.c.l.b16 %v271
      %v596 = vunpack.c.l.b16 %v272
      %v597 = vunpack.c.l.b16 %v273
      %v598 = vunpack.c.l.b16 %v274
      %v599 = vunpack.c.l.b16 %v275
      %v600 = vunpack.c.l.b16 %v276
      %v601 = vunpack.c.l.b16 %v277
      %v602 = vunpack.c.l.b16 %v278
      %v603 = vunpack.c.l.b16 %v279
      %v604 = vunpack.c.l.b16 %v280
      %v605 = vunpack.c.l.b16 %v281
      %v606 = vunpack.c.l.b16 %v282
      %v607 = vunpack.c.l.b16 %v283
      %v608 = vunpack.c.l.b16 %v284
      %v609 = vunpack.c.l.b16 %v285
      %v610 = vunpack.c.l.b16 %v286
      %v611 = vunpack.c.l.b16 %v287
      %v612 = vunpack.c.l.b16 %v288
      %v613 = vunpack.c.l.b16 %v289
      %v614 = vunpack.c.l.b16 %v290
      %v615 = vunpack.c.l.b16 %v291
      %v616 = vunpack.c.l.b16 %v292
      %v617 = vunpack.c.l.b16 %v293
      %v618 = vunpack.c.l.b16 %v294
      %v619 = vunpack.c.l.b16 %v295
      %v620 = vunpack.c.l.b16 %v296
      %v621 = vunpack.c.l.b16 %v297
      %v622 = vunpack.c.l.b16 %v298
      %v623 = vpack.c.b16 %v496, %v495
      %v624 = vpack.c.b16 %v498, %v497
      %v625 = vpack.c.b16 %v500, %v499
      %v626 = vpack.c.b16 %v502, %v501
      %v627 = vpack.c.b16 %v504, %v503
      %v628 = vpack.c.b16 %v506, %v505
      %v629 = vpack.c.b16 %v508, %v507
      %v630 = vpack.c.b16 %v510, %v509
      %v631 = vpack.c.b16 %v512, %v511
      %v632 = vpack.c.b16 %v514, %v513
      %v633 = vpack.c.b16 %v516, %v515
      %v634 = vpack.c.b16 %v518, %v517
      %v635 = vpack.c.b16 %v520, %v519
      %v636 = vpack.c.b16 %v522, %v521
      %v637 = vpack.c.b16 %v524, %v523
      %v638 = vpack.c.b16 %v526, %v525
      %v639 = vpack.c.b16 %v528, %v527
      %v640 = vpack.c.b16 %v530, %v529
      %v641 = vpack.c.b16 %v532, %v531
      %v642 = vpack.c.b16 %v534, %v533
      %v643 = vpack.c.b16 %v536, %v535
      %v644 = vpack.c.b16 %v538, %v537
      %v645 = vpack.c.b16 %v540, %v539
      %v646 = vpack.c.b16 %v542, %v541
      %v647 = vpack.c.b16 %v544, %v543
      %v648 = vpack.c.b16 %v546, %v545
      %v649 = vpack.c.b16 %v548, %v547
      %v650 = vpack.c.b16 %v550, %v549
      %v651 = vpack.c.b16 %v552, %v551
      %v652 = vpack.c.b16 %v554, %v553
      %v653 = vpack.c.b16 %v556, %v555
      %v654 = vpack.c.b16 %v558, %v557
      %v655 = vpack.c.b16 %v560, %v559
      %v656 = vpack.c.b16 %v562, %v561
      %v657 = vpack.c.b16 %v564, %v563
      %v658 = vpack.c.b16 %v566, %v565
      %v659 = vpack.c.b16 %v568, %v567
      %v660 = vpack.c.b16 %v570, %v569
      %v661 = vpack.c.b16 %v572, %v571
      %v662 = vpack.c.b16 %v574, %v573
      %v663 = vpack.c.b16 %v576, %v575
      %v664 = vpack.c.b16 %v578, %v577
      %v665 = vpack.c.b16 %v580, %v579
      %v666 = vpack.c.b16 %v582, %v581
      %v667 = vpack.c.b16 %v584, %v583
      %v668 = vpack.c.b16 %v586, %v585
      %v669 = vpack.c.b16 %v588, %v587
      %v670 = vpack.c.b16 %v590, %v589
      %v671 = vpack.c.b16 %v592, %v591
      %v672 = vpack.c.b16 %v594, %v593
      %v673 = vpack.c.b16 %v596, %v595
      %v674 = vpack.c.b16 %v598, %v597
      %v675 = vpack.c.b16 %v600, %v599
      %v676 = vpack.c.b16 %v602, %v601
      %v677 = vpack.c.b16 %v604, %v603
      %v678 = vpack.c.b16 %v606, %v605
      %v679 = vpack.c.b16 %v608, %v607
      %v680 = vpack.c.b16 %v610, %v609
      %v681 = vpack.c.b16 %v612, %v611
      %v682 = vpack.c.b16 %v614, %v613
      %v683 = vpack.c.b16 %v616, %v615
      %v684 = vpack.c.b16 %v618, %v617
      %v685 = vpack.c.b16 %v620, %v619
      %v686 = vpack.c.b16 %v622, %v621
      %751 = vmatprep.subr.bf16.mxu0 0
      %752 = vmatpush1.bf16.msra.mxu0 %v623
      %753 = vmatprep.subr.bf16.mxu0 0
      %754 = vmatpush1.bf16.msra.mxu0 %v624
      %755 = vmatprep.subr.bf16.mxu0 0
      %756 = vmatpush1.bf16.msra.mxu0 %v625
      %757 = vmatprep.subr.bf16.mxu0 0
      %758 = vmatpush1.bf16.msra.mxu0 %v626
      %759 = vmatprep.subr.bf16.mxu0 0
      %760 = vmatpush1.bf16.msra.mxu0 %v627
      %761 = vmatprep.subr.bf16.mxu0 0
      %762 = vmatpush1.bf16.msra.mxu0 %v628
      %763 = vmatprep.subr.bf16.mxu0 0
      %764 = vmatpush1.bf16.msra.mxu0 %v629
      %765 = vmatprep.subr.bf16.mxu0 0
      %766 = vmatpush1.bf16.msra.mxu0 %v630
      %767 = vmatprep.subr.bf16.mxu0 0
      %768 = vmatpush1.bf16.msra.mxu0 %v631
      %769 = vmatprep.subr.bf16.mxu0 0
      %770 = vmatpush1.bf16.msra.mxu0 %v632
      %771 = vmatprep.subr.bf16.mxu0 0
      %772 = vmatpush1.bf16.msra.mxu0 %v633
      %773 = vmatprep.subr.bf16.mxu0 0
      %774 = vmatpush1.bf16.msra.mxu0 %v634
      %775 = vmatprep.subr.bf16.mxu0 0
      %776 = vmatpush1.bf16.msra.mxu0 %v635
      %777 = vmatprep.subr.bf16.mxu0 0
      %778 = vmatpush1.bf16.msra.mxu0 %v636
      %779 = vmatprep.subr.bf16.mxu0 0
      %780 = vmatpush1.bf16.msra.mxu0 %v637
      %781 = vmatprep.subr.bf16.mxu0 0
      %782 = vmatpush1.bf16.msra.mxu0 %v638
      %783 = vmatprep.mubr.bf16.mxu0 %v347
      %784 = vmatmul.mubr.bf16.gmra.mrb[0].mxu0 %v333
      %v785 = vpop.f32.mrb[0].mxu0
      %v786 = vadd.f32 %v308, %v785
      %v787 = vpop.f32.mrb[0].mxu0
      %v788 = vpop.f32.mrb[0].mxu0
      %v789 = vpop.f32.mrb[0].mxu0
      %790 = vdwg.mxu0
      %791 = vmatprep.subr.bf16.mxu0 0
      %792 = vmatpush1.bf16.msra.mxu0 %v639
      %793 = vmatprep.subr.bf16.mxu0 0
      %794 = vmatpush1.bf16.msra.mxu0 %v640
      %795 = vmatprep.subr.bf16.mxu0 0
      %796 = vmatpush1.bf16.msra.mxu0 %v641
      %797 = vmatprep.subr.bf16.mxu0 0
      %798 = vmatpush1.bf16.msra.mxu0 %v642
      %799 = vmatprep.subr.bf16.mxu0 0
      %800 = vmatpush1.bf16.msra.mxu0 %v643
      %801 = vmatprep.subr.bf16.mxu0 0
      %802 = vmatpush1.bf16.msra.mxu0 %v644
      %803 = vmatprep.subr.bf16.mxu0 0
      %804 = vmatpush1.bf16.msra.mxu0 %v645
      %805 = vmatprep.subr.bf16.mxu0 0
      %806 = vmatpush1.bf16.msra.mxu0 %v646
      %807 = vmatprep.subr.bf16.mxu0 0
      %808 = vmatpush1.bf16.msra.mxu0 %v647
      %809 = vmatprep.subr.bf16.mxu0 0
      %810 = vmatpush1.bf16.msra.mxu0 %v648
      %811 = vmatprep.subr.bf16.mxu0 0
      %812 = vmatpush1.bf16.msra.mxu0 %v649
      %813 = vmatprep.subr.bf16.mxu0 0
      %814 = vmatpush1.bf16.msra.mxu0 %v650
      %815 = vmatprep.subr.bf16.mxu0 0
      %816 = vmatpush1.bf16.msra.mxu0 %v651
      %817 = vmatprep.subr.bf16.mxu0 0
      %818 = vmatpush1.bf16.msra.mxu0 %v652
      %819 = vmatprep.subr.bf16.mxu0 0
      %820 = vmatpush1.bf16.msra.mxu0 %v653
      %821 = vmatprep.subr.bf16.mxu0 0
      %822 = vmatpush1.bf16.msra.mxu0 %v654
      %823 = vmatprep.mubr.bf16.mxu0 %v357
      %824 = vmatmul.mubr.bf16.gmra.mrb[0].mxu0 %v355
      %v825 = vpop.f32.mrb[0].mxu0
      %v826 = vadd.f32 %v786, %v825
      %v827 = vpop.f32.mrb[0].mxu0
      %v828 = vpop.f32.mrb[0].mxu0
      %v829 = vpop.f32.mrb[0].mxu0
      %830 = vdwg.mxu0
      %831 = vmatprep.subr.bf16.mxu0 0
      %832 = vmatpush1.bf16.msra.mxu0 %v655
      %833 = vmatprep.subr.bf16.mxu0 0
      %834 = vmatpush1.bf16.msra.mxu0 %v656
      %835 = vmatprep.subr.bf16.mxu0 0
      %836 = vmatpush1.bf16.msra.mxu0 %v657
      %837 = vmatprep.subr.bf16.mxu0 0
      %838 = vmatpush1.bf16.msra.mxu0 %v658
      %839 = vmatprep.subr.bf16.mxu0 0
      %840 = vmatpush1.bf16.msra.mxu0 %v659
      %841 = vmatprep.subr.bf16.mxu0 0
      %842 = vmatpush1.bf16.msra.mxu0 %v660
      %843 = vmatprep.subr.bf16.mxu0 0
      %844 = vmatpush1.bf16.msra.mxu0 %v661
      %845 = vmatprep.subr.bf16.mxu0 0
      %846 = vmatpush1.bf16.msra.mxu0 %v662
      %847 = vmatprep.subr.bf16.mxu0 0
      %848 = vmatpush1.bf16.msra.mxu0 %v663
      %849 = vmatprep.subr.bf16.mxu0 0
      %850 = vmatpush1.bf16.msra.mxu0 %v664
      %851 = vmatprep.subr.bf16.mxu0 0
      %852 = vmatpush1.bf16.msra.mxu0 %v665
      %853 = vmatprep.subr.bf16.mxu0 0
      %854 = vmatpush1.bf16.msra.mxu0 %v666
      %855 = vmatprep.subr.bf16.mxu0 0
      %856 = vmatpush1.bf16.msra.mxu0 %v667
      %857 = vmatprep.subr.bf16.mxu0 0
      %858 = vmatpush1.bf16.msra.mxu0 %v668
      %859 = vmatprep.subr.bf16.mxu0 0
      %860 = vmatpush1.bf16.msra.mxu0 %v669
      %861 = vmatprep.subr.bf16.mxu0 0
      %862 = vmatpush1.bf16.msra.mxu0 %v670
      %863 = vmatprep.mubr.bf16.mxu0 %v354
      %864 = vmatmul.mubr.bf16.gmra.mrb[0].mxu0 %v340
      %v865 = vpop.f32.mrb[0].mxu0
      %v866 = vadd.f32 %v826, %v865
      %v867 = vpop.f32.mrb[0].mxu0
      %v868 = vpop.f32.mrb[0].mxu0
      %v869 = vpop.f32.mrb[0].mxu0
      %870 = vdwg.mxu0
      %871 = vmatprep.subr.bf16.mxu0 0
      %872 = vmatpush1.bf16.msra.mxu0 %v671
      %873 = vmatprep.subr.bf16.mxu0 0
      %874 = vmatpush1.bf16.msra.mxu0 %v672
      %875 = vmatprep.subr.bf16.mxu0 0
      %876 = vmatpush1.bf16.msra.mxu0 %v673
      %877 = vmatprep.subr.bf16.mxu0 0
      %878 = vmatpush1.bf16.msra.mxu0 %v674
      %879 = vmatprep.subr.bf16.mxu0 0
      %880 = vmatpush1.bf16.msra.mxu0 %v675
      %881 = vmatprep.subr.bf16.mxu0 0
      %882 = vmatpush1.bf16.msra.mxu0 %v676
      %883 = vmatprep.subr.bf16.mxu0 0
      %884 = vmatpush1.bf16.msra.mxu0 %v677
      %885 = vmatprep.subr.bf16.mxu0 0
      %886 = vmatpush1.bf16.msra.mxu0 %v678
      %887 = vmatprep.subr.bf16.mxu0 0
      %888 = vmatpush1.bf16.msra.mxu0 %v679
      %889 = vmatprep.subr.bf16.mxu0 0
      %890 = vmatpush1.bf16.msra.mxu0 %v680
      %891 = vmatprep.subr.bf16.mxu0 0
      %892 = vmatpush1.bf16.msra.mxu0 %v681
      %893 = vmatprep.subr.bf16.mxu0 0
      %894 = vmatpush1.bf16.msra.mxu0 %v682
      %895 = vmatprep.subr.bf16.mxu0 0
      %896 = vmatpush1.bf16.msra.mxu0 %v683
      %897 = vmatprep.subr.bf16.mxu0 0
      %898 = vmatpush1.bf16.msra.mxu0 %v684
      %899 = vmatprep.subr.bf16.mxu0 0
      %900 = vmatpush1.bf16.msra.mxu0 %v685
      %901 = vmatprep.subr.bf16.mxu0 0
      %902 = vmatpush1.bf16.msra.mxu0 %v686
      %903 = vmatprep.mubr.bf16.mxu0 %v358
      %904 = vmatmul.mubr.bf16.gmra.mrb[0].mxu0 %v356
      %v905 = vpop.f32.mrb[0].mxu0
      %v906 = vadd.f32 %v866, %v905
      %v907 = vpop.f32.mrb[0].mxu0
      %v908 = vpop.f32.mrb[0].mxu0
      %v909 = vpop.f32.mrb[0].mxu0
      %910 = vdwg.mxu0
      %vm911 = vcmask 24576
      %912 = vst.msk [vmem:[%s168] sm:$0x1] %vm911, %v906
      %p913 = scmp.lt.s32.totalorder %s16, 1
      %s914 = scalar_select %p913, %s16, 1
      %s915 = scalar_lea.vmem %s3, %s914
      // Predicated region
      $region33: #{discriminator_forward.9} parent=31 // pred_check
        %p916 = pneg %p102
      $region34: #{discriminator_forward.9} parent=31 // pred_check_branch
        %918 = sbr.rel (%p916) target = $region36
      $region35: #{discriminator_forward.9} parent=31 // pred_region
        _
      $region36: #{discriminator_forward.9} parent=31 // pred_fallthru
        _
    $region32: #{discriminator_forward.9} parent=5 // pred_fallthru
      _
    %p919 = scmp.le.s32.totalorder 2, %s11
    // Predicated region
    $region37: #{discriminator_forward.9} parent=5 // pred_check
      %p920 = pneg %p919
    $region38: #{discriminator_forward.9} parent=5 // pred_check_branch
      %922 = sbr.rel (%p920) target = $region40
    $region39: #{discriminator_forward.9} parent=5 // pred_region
      %s923 = ssub.s32 %s11, 2
      // Predicated region
      $region41: #{discriminator_forward.9} parent=39 // pred_check
        %p924 = pneg %p108
      $region42: #{discriminator_forward.9} parent=39 // pred_check_branch
        %926 = sbr.rel (%p924) target = $region44
      $region43: #{discriminator_forward.9} parent=39 // pred_region
        %p927 = scmp.lt.s32.totalorder %s17, 1
        %s928 = scalar_select %p927, %s17, 1
        %s929 = scalar_lea.vmem %s3, %s928
      $region44: #{discriminator_forward.9} parent=39 // pred_fallthru
        _
    $region40: #{discriminator_forward.9} parent=5 // pred_fallthru
      _
  $region6: #{discriminator_forward.9} parent=0 // loop_footer
    %s15 = sadd.s32 1, %s11
  $region7: #{discriminator_forward.9} parent=0 // loop_footer_branch
    %10 = sbr.rel target = $region3
  $region8: #{discriminator_forward.9} parent=0 // loop_exit
    _

</llo_original>
